<compile_context>
chip_gen: v6e
topology: v6e:2x2x1
jax: 0.10.0
libtpu: 0.0.40
codegen_flags: <defaults>
</compile_context>

<pallas_src>
import numpy as np
import jax
import jax.numpy as jnp
from jax import lax
from jax.experimental import pallas as pl
from jax.experimental.pallas import tpu as pltpu

LN_EPS = 1e-5       # nn.LayerNorm default eps
NORM_EPS = 1e-12    # F.normalize default eps


# ---------------------------------------------------------------------------
# Host-side helpers (exact PyTorch semantics)
# ---------------------------------------------------------------------------
def _torch_patch_pool(x_nhwc, patch):
    """Replicates x.unfold(1,P,P).unfold(2,P,P).reshape(B,-1,P*P,C).mean(-1)."""
    B, H, W, C = x_nhwc.shape
    P = patch
    h, w = H // P, W // P
    t = x_nhwc.reshape(B, h, P, w, P, C)
    t = jnp.transpose(t, (0, 1, 3, 5, 2, 4))      # (B, h, w, C, P, P)  == torch unfold
    t = t.reshape(B, h * w, P * P, C)             # torch .reshape (row-major regroup)
    return jnp.mean(t, axis=-1)                   # (B, N, P*P)


def _bilinear_matrix(out_size, in_size):
    """F.interpolate(mode='bilinear', align_corners=False) as a dense (out,in) matrix."""
    scale = in_size / out_size
    o = np.arange(out_size, dtype=np.float64)
    src = np.clip((o + 0.5) * scale - 0.5, 0.0, None)      # torch clamps negatives to 0
    i0 = np.minimum(np.floor(src).astype(np.int64), in_size - 1)
    i1 = np.minimum(i0 + 1, in_size - 1)
    w1 = src - i0
    w0 = 1.0 - w1
    M = np.zeros((out_size, in_size), dtype=np.float64)
    np.add.at(M, (np.arange(out_size), i0), w0)
    np.add.at(M, (np.arange(out_size), i1), w1)
    return M.astype(np.float32)


# ---------------------------------------------------------------------------
# Fused Pallas kernel (one grid step per batch element)
# ---------------------------------------------------------------------------
def _lga_kernel(pooled_ref, w1_ref, b1_ref, g_ref, bta_ref, w2_ref, b2_ref,
                pn_ref, t_ref, u_ref, wc_ref, bc_ref, out_ref):
    # pooled_ref: (1, N, P*P)   weights: full arrays   out_ref: (1, H*W, D)
    p = pooled_ref[0]                                                   # (N, P*P)

    # mlp1 (K = P*P is tiny; one small matmul — negligible at these sizes)
    z = jnp.dot(p, w1_ref[...], preferred_element_type=jnp.float32) + b1_ref[...]

    # LayerNorm over the feature dim (biased variance, like nn.LayerNorm)
    mu = jnp.mean(z, axis=-1, keepdims=True)
    zc = z - mu
    var = jnp.mean(zc * zc, axis=-1, keepdims=True)
    z = zc * lax.rsqrt(var + LN_EPS) * g_ref[...] + bta_ref[...]

    # mlp2
    z2 = jnp.dot(z, w2_ref[...], preferred_element_type=jnp.float32) + b2_ref[...]

    # softmax gate:  local_out = z2 * softmax(z2)
    m = jnp.max(z2, axis=-1, keepdims=True)
    e = jnp.exp(z2 - m)
    att = e / jnp.sum(e, axis=-1, keepdims=True)
    lo = z2 * att

    # cosine similarity with the (pre-normalized) prompt, clamp to [0,1] -> mask
    nrm = jnp.sqrt(jnp.sum(lo * lo, axis=-1, keepdims=True))
    lo_n = lo / jnp.maximum(nrm, NORM_EPS)
    cos = jnp.sum(lo_n * pn_ref[...], axis=-1, keepdims=True)           # (N, 1)
    mask = jnp.clip(cos, 0.0, 1.0)
    lo = lo * mask

    # top-down transform (D x D, MXU)
    lo = jnp.dot(lo, t_ref[...], preferred_element_type=jnp.float32)    # (N, D)

    # bilinear upsample as ONE matmul with the precomputed kron(Wy, Wx) matrix
    up = jnp.dot(u_ref[...], lo, preferred_element_type=jnp.float32)    # (H*W, D)

    # fused 1x1 conv (lane-dense (H*W, D) store)
    y = jnp.dot(up, wc_ref[...], preferred_element_type=jnp.float32) + bc_ref[...]
    out_ref[0] = y.astype(out_ref.dtype)


# ---------------------------------------------------------------------------
# Wrapper
# ---------------------------------------------------------------------------
def local_global_attention(x_nchw, params, patch_size):
    B, C, H, W = x_nchw.shape
    P = patch_size
    h, w = H // P, W // P
    N = h * w
    PP = P * P
    D2 = params["w1"].shape[1]
    D = params["w2"].shape[1]
    HW = H * W

    x_nhwc = jnp.transpose(x_nchw, (0, 2, 3, 1))
    pooled = _torch_patch_pool(x_nhwc, P)                               # (B, N, PP)

    # normalize the prompt once on the host (identical math to F.normalize(dim=1))
    pn = (params["prompt"] /
          jnp.maximum(jnp.linalg.norm(params["prompt"]), NORM_EPS)).reshape(1, D)

    # bilinear upsample folded into one constant matrix
    Wy = _bilinear_matrix(H, h)
    Wx = _bilinear_matrix(W, w)
    U = jnp.asarray(np.kron(Wy, Wx))                                    # (H*W, N)

    b1r = params["b1"].reshape(1, D2)
    gr = params["gamma"].reshape(1, D2)
    btr = params["beta"].reshape(1, D2)
    b2r = params["b2"].reshape(1, D)
    bcr = params["bc"].reshape(1, D)

    operands = (pooled, params["w1"], b1r, gr, btr, params["w2"], b2r, pn,
                params["T"], U, params["wc"], bcr)

    flops = 2 * B * (N * PP * D2 + N * D2 * D + N * D * D + HW * N * D + HW * D * D)
    bytes_accessed = 4 * (sum(int(np.prod(a.shape)) for a in operands) + B * HW * D)
    cost = pl.CostEstimate(flops=flops,
                           transcendentals=B * N * (D + D2),
                           bytes_accessed=bytes_accessed)

    const2 = lambda b: (0, 0)
    out = pl.pallas_call(
        _lga_kernel,
        out_shape=jax.ShapeDtypeStruct((B, HW, D), jnp.float32),
        grid=(B,),
        in_specs=[
            pl.BlockSpec((1, N, PP), lambda b: (b, 0, 0)),   # pooled patches
            pl.BlockSpec((PP, D2), const2),                  # mlp1 W
            pl.BlockSpec((1, D2), const2),                   # mlp1 b
            pl.BlockSpec((1, D2), const2),                   # LN gamma
            pl.BlockSpec((1, D2), const2),                   # LN beta
            pl.BlockSpec((D2, D), const2),                   # mlp2 W
            pl.BlockSpec((1, D), const2),                    # mlp2 b
            pl.BlockSpec((1, D), const2),                    # normalized prompt
            pl.BlockSpec((D, D), const2),                    # top_down_transform
            pl.BlockSpec((HW, N), const2),                   # bilinear kron matrix
            pl.BlockSpec((D, D), const2),                    # 1x1 conv W
            pl.BlockSpec((1, D), const2),                    # 1x1 conv b
        ],
        out_specs=pl.BlockSpec((1, HW, D), lambda b: (b, 0, 0)),
        compiler_params=pltpu.CompilerParams(dimension_semantics=("parallel",)),
        cost_estimate=cost,
    )(*operands)

    out = out.reshape(B, H, W, D)
    return jnp.transpose(out, (0, 3, 1, 2))                             # NHWC -> NCHW


# ---------------------------------------------------------------------------
# Pure-JAX reference (independent compute path for the upsample)
# ---------------------------------------------------------------------------
def local_global_attention_ref(x_nchw, params, patch_size):
    B, C, H, W = x_nchw.shape
    P = patch_size
    h, w = H // P, W // P
    x = jnp.transpose(x_nchw, (0, 2, 3, 1))
    pooled = _torch_patch_pool(x, P)
    z = pooled @ params["w1"] + params["b1"]
    mu = z.mean(-1, keepdims=True)
    var = ((z - mu) ** 2).mean(-1, keepdims=True)
    z = (z - mu) / jnp.sqrt(var + LN_EPS) * params["gamma"] + params["beta"]
    z2 = z @ params["w2"] + params["b2"]
    att = jax.nn.softmax(z2, axis=-1)
    lo = z2 * att
    nrm = jnp.linalg.norm(lo, axis=-1, keepdims=True)
    lo_n = lo / jnp.maximum(nrm, NORM_EPS)
    pn = params["prompt"] / jnp.maximum(jnp.linalg.norm(params["prompt"]), NORM_EPS)
    cos = jnp.einsum("bnd,d->bn", lo_n, pn)[..., None]
    lo = lo * jnp.clip(cos, 0.0, 1.0)
    lo = lo @ params["T"]
    D = lo.shape[-1]
    lo = lo.reshape(B, h, w, D)
    Wy = jnp.asarray(_bilinear_matrix(H, h))
    Wx = jnp.asarray(_bilinear_matrix(W, w))
    up = jnp.einsum("Yi,bijd->bYjd", Wy, lo)
    up = jnp.einsum("Xj,bYjd->bYXd", Wx, up)
    y = up @ params["wc"] + params["bc"]
    return jnp.transpose(y, (0, 3, 1, 2))


# ---------------------------------------------------------------------------
# Deterministic synthetic parameters (matching the nn.Module's parameter set)
# ---------------------------------------------------------------------------
def make_params(key, output_dim, patch_size):
    D = output_dim
    D2 = D // 2
    PP = patch_size * patch_size
    ks = jax.random.split(key, 10)
    w1 = jax.random.normal(ks[0], (PP, D2), jnp.float32) / np.sqrt(PP)
    b1 = 0.02 * jax.random.normal(ks[1], (D2,), jnp.float32)
    gamma = 1.0 + 0.1 * jax.random.normal(ks[2], (D2,), jnp.float32)
    beta = 0.02 * jax.random.normal(ks[3], (D2,), jnp.float32)
    w2 = jax.random.normal(ks[4], (D2, D), jnp.float32) / np.sqrt(D2)
    b2 = 0.02 * jax.random.normal(ks[5], (D,), jnp.float32)
    prompt = jax.random.normal(ks[6], (D,), jnp.float32)
    T = jnp.eye(D, dtype=jnp.float32) + 0.05 * jax.random.normal(ks[7], (D, D), jnp.float32)
    wc = jax.random.normal(ks[8], (D, D), jnp.float32) / np.sqrt(D)
    bc = 0.02 * jax.random.normal(ks[9], (D,), jnp.float32)
    return dict(w1=w1, b1=b1, gamma=gamma, beta=beta, w2=w2, b2=b2,
                prompt=prompt, T=T, wc=wc, bc=bc)


if __name__ == "__main__":
    key = jax.random.PRNGKey(0)
    kp, kx = jax.random.split(key)

    # LocalGlobalAttention(output_dim=128, patch_size=2) on a (2, 4, 16, 16) input.
    B, C, H, W = 2, 4, 16, 16
    output_dim, patch_size = 128, 2

    params = make_params(kp, output_dim, patch_size)
    x = jax.random.normal(kx, (B, C, H, W), jnp.float32)          # NCHW like PyTorch

    out = jax.block_until_ready(local_global_attention(x, params, patch_size))
    ref = jax.block_until_ready(local_global_attention_ref(x, params, patch_size))

    assert out.shape == (B, output_dim, H, W), out.shape
    np.testing.assert_allclose(np.asarray(out), np.asarray(ref), rtol=1e-4, atol=1e-4)

    print("KERNEL_OK")
</pallas_src>

<mosaic_0001>
module attributes {stable_mosaic.version = 11 : i64} {
  func.func @_lga_kernel(%arg0: i32, %arg1: memref<1x64x4xf32, #tpu.memory_space<vmem>>, %arg2: memref<4x64xf32, #tpu.memory_space<vmem>>, %arg3: memref<1x64xf32, #tpu.memory_space<vmem>>, %arg4: memref<1x64xf32, #tpu.memory_space<vmem>>, %arg5: memref<1x64xf32, #tpu.memory_space<vmem>>, %arg6: memref<64x128xf32, #tpu.memory_space<vmem>>, %arg7: memref<1x128xf32, #tpu.memory_space<vmem>>, %arg8: memref<1x128xf32, #tpu.memory_space<vmem>>, %arg9: memref<128x128xf32, #tpu.memory_space<vmem>>, %arg10: memref<256x64xf32, #tpu.memory_space<vmem>>, %arg11: memref<128x128xf32, #tpu.memory_space<vmem>>, %arg12: memref<1x128xf32, #tpu.memory_space<vmem>>, %arg13: memref<1x256x128xf32, #tpu.memory_space<vmem>>) attributes {dimension_semantics = [#tpu.dimension_semantics<parallel>], iteration_bounds = array<i64: 2>, scalar_prefetch = 0 : i64, scratch_operands = 0 : i64, tpu.core_type = #tpu.core_type<tc>, window_params = [{transform_indices = @transform_0, window_bounds = array<i64: 1, 64, 4>}, {pipeline_mode = #tpu.pipeline_mode<synchronous>, transform_indices = @transform_1, window_bounds = array<i64: 4, 64>}, {pipeline_mode = #tpu.pipeline_mode<synchronous>, transform_indices = @transform_2, window_bounds = array<i64: 1, 64>}, {pipeline_mode = #tpu.pipeline_mode<synchronous>, transform_indices = @transform_3, window_bounds = array<i64: 1, 64>}, {pipeline_mode = #tpu.pipeline_mode<synchronous>, transform_indices = @transform_4, window_bounds = array<i64: 1, 64>}, {pipeline_mode = #tpu.pipeline_mode<synchronous>, transform_indices = @transform_5, window_bounds = array<i64: 64, 128>}, {pipeline_mode = #tpu.pipeline_mode<synchronous>, transform_indices = @transform_6, window_bounds = array<i64: 1, 128>}, {pipeline_mode = #tpu.pipeline_mode<synchronous>, transform_indices = @transform_7, window_bounds = array<i64: 1, 128>}, {pipeline_mode = #tpu.pipeline_mode<synchronous>, transform_indices = @transform_8, window_bounds = array<i64: 128, 128>}, {pipeline_mode = #tpu.pipeline_mode<synchronous>, transform_indices = @transform_9, window_bounds = array<i64: 256, 64>}, {pipeline_mode = #tpu.pipeline_mode<synchronous>, transform_indices = @transform_10, window_bounds = array<i64: 128, 128>}, {pipeline_mode = #tpu.pipeline_mode<synchronous>, transform_indices = @transform_11, window_bounds = array<i64: 1, 128>}, {transform_indices = @transform_12, window_bounds = array<i64: 1, 256, 128>}]} {
    %c0 = arith.constant 0 : index
    %c0_0 = arith.constant 0 : index
    %c0_1 = arith.constant 0 : index
    %0 = vector.load %arg1[%c0, %c0_0, %c0_1] : memref<1x64x4xf32, #tpu.memory_space<vmem>>, vector<1x64x4xf32>
    %1 = vector.shape_cast %0 : vector<1x64x4xf32> to vector<64x4xf32>
    %c0_2 = arith.constant 0 : index
    %c0_3 = arith.constant 0 : index
    %2 = vector.load %arg2[%c0_2, %c0_3] : memref<4x64xf32, #tpu.memory_space<vmem>>, vector<4x64xf32>
    %cst = arith.constant dense<0.000000e+00> : vector<64x64xf32>
    %3 = tpu.matmul %1, %2, %cst {dimension_numbers = #tpu.dot_dimension_numbers<[1], [0], [0], [1], [0, 0, 1, 1], [], []>} : vector<64x4xf32>, vector<4x64xf32>, vector<64x64xf32> -> vector<64x64xf32>
    %c0_4 = arith.constant 0 : index
    %c0_5 = arith.constant 0 : index
    %4 = vector.load %arg3[%c0_4, %c0_5] : memref<1x64xf32, #tpu.memory_space<vmem>>, vector<1x64xf32>
    %5 = vector.broadcast %4 : vector<1x64xf32> to vector<64x64xf32>
    %6 = arith.addf %3, %5 : vector<64x64xf32>
    %cst_6 = arith.constant dense<0.000000e+00> : vector<64xf32>
    %7 = vector.multi_reduction <add>, %6, %cst_6 [1] : vector<64x64xf32> to vector<64xf32>
    %8 = vector.shape_cast %7 : vector<64xf32> to vector<64x1xf32>
    %cst_7 = arith.constant 6.400000e+01 : f32
    %9 = vector.broadcast %cst_7 : f32 to vector<64x1xf32>
    %10 = arith.divf %8, %9 : vector<64x1xf32>
    %11 = vector.broadcast %10 : vector<64x1xf32> to vector<64x64xf32>
    %12 = arith.subf %6, %11 : vector<64x64xf32>
    %13 = arith.mulf %12, %12 : vector<64x64xf32>
    %cst_8 = arith.constant dense<0.000000e+00> : vector<64xf32>
    %14 = vector.multi_reduction <add>, %13, %cst_8 [1] : vector<64x64xf32> to vector<64xf32>
    %15 = vector.shape_cast %14 : vector<64xf32> to vector<64x1xf32>
    %cst_9 = arith.constant 6.400000e+01 : f32
    %16 = vector.broadcast %cst_9 : f32 to vector<64x1xf32>
    %17 = arith.divf %15, %16 : vector<64x1xf32>
    %cst_10 = arith.constant 9.99999974E-6 : f32
    %18 = vector.broadcast %cst_10 : f32 to vector<64x1xf32>
    %19 = arith.addf %17, %18 : vector<64x1xf32>
    %20 = math.rsqrt %19 : vector<64x1xf32>
    %21 = vector.broadcast %20 : vector<64x1xf32> to vector<64x64xf32>
    %22 = arith.mulf %12, %21 : vector<64x64xf32>
    %c0_11 = arith.constant 0 : index
    %c0_12 = arith.constant 0 : index
    %23 = vector.load %arg4[%c0_11, %c0_12] : memref<1x64xf32, #tpu.memory_space<vmem>>, vector<1x64xf32>
    %24 = vector.broadcast %23 : vector<1x64xf32> to vector<64x64xf32>
    %25 = arith.mulf %22, %24 : vector<64x64xf32>
    %c0_13 = arith.constant 0 : index
    %c0_14 = arith.constant 0 : index
    %26 = vector.load %arg5[%c0_13, %c0_14] : memref<1x64xf32, #tpu.memory_space<vmem>>, vector<1x64xf32>
    %27 = vector.broadcast %26 : vector<1x64xf32> to vector<64x64xf32>
    %28 = arith.addf %25, %27 : vector<64x64xf32>
    %c0_15 = arith.constant 0 : index
    %c0_16 = arith.constant 0 : index
    %29 = vector.load %arg6[%c0_15, %c0_16] : memref<64x128xf32, #tpu.memory_space<vmem>>, vector<64x128xf32>
    %cst_17 = arith.constant dense<0.000000e+00> : vector<64x128xf32>
    %30 = tpu.matmul %28, %29, %cst_17 {dimension_numbers = #tpu.dot_dimension_numbers<[1], [0], [0], [1], [0, 0, 1, 1], [], []>} : vector<64x64xf32>, vector<64x128xf32>, vector<64x128xf32> -> vector<64x128xf32>
    %c0_18 = arith.constant 0 : index
    %c0_19 = arith.constant 0 : index
    %31 = vector.load %arg7[%c0_18, %c0_19] : memref<1x128xf32, #tpu.memory_space<vmem>>, vector<1x128xf32>
    %32 = vector.broadcast %31 : vector<1x128xf32> to vector<64x128xf32>
    %33 = arith.addf %30, %32 : vector<64x128xf32>
    %cst_20 = arith.constant dense<0xFF800000> : vector<64xf32>
    %34 = vector.multi_reduction <maximumf>, %33, %cst_20 [1] : vector<64x128xf32> to vector<64xf32>
    %35 = vector.shape_cast %34 : vector<64xf32> to vector<64x1xf32>
    %36 = vector.broadcast %35 : vector<64x1xf32> to vector<64x128xf32>
    %37 = arith.subf %33, %36 : vector<64x128xf32>
    %38 = math.exp %37 : vector<64x128xf32>
    %cst_21 = arith.constant dense<0.000000e+00> : vector<64xf32>
    %39 = vector.multi_reduction <add>, %38, %cst_21 [1] : vector<64x128xf32> to vector<64xf32>
    %40 = vector.shape_cast %39 : vector<64xf32> to vector<64x1xf32>
    %41 = vector.broadcast %40 : vector<64x1xf32> to vector<64x128xf32>
    %42 = arith.divf %38, %41 : vector<64x128xf32>
    %43 = arith.mulf %33, %42 : vector<64x128xf32>
    %44 = arith.mulf %43, %43 : vector<64x128xf32>
    %cst_22 = arith.constant dense<0.000000e+00> : vector<64xf32>
    %45 = vector.multi_reduction <add>, %44, %cst_22 [1] : vector<64x128xf32> to vector<64xf32>
    %46 = vector.shape_cast %45 : vector<64xf32> to vector<64x1xf32>
    %47 = math.sqrt %46 : vector<64x1xf32>
    %cst_23 = arith.constant 9.99999996E-13 : f32
    %48 = vector.broadcast %cst_23 : f32 to vector<64x1xf32>
    %49 = arith.maximumf %47, %48 : vector<64x1xf32>
    %50 = vector.broadcast %49 : vector<64x1xf32> to vector<64x128xf32>
    %51 = arith.divf %43, %50 : vector<64x128xf32>
    %c0_24 = arith.constant 0 : index
    %c0_25 = arith.constant 0 : index
    %52 = vector.load %arg8[%c0_24, %c0_25] : memref<1x128xf32, #tpu.memory_space<vmem>>, vector<1x128xf32>
    %53 = vector.broadcast %52 : vector<1x128xf32> to vector<64x128xf32>
    %54 = arith.mulf %51, %53 : vector<64x128xf32>
    %cst_26 = arith.constant dense<0.000000e+00> : vector<64xf32>
    %55 = vector.multi_reduction <add>, %54, %cst_26 [1] : vector<64x128xf32> to vector<64xf32>
    %56 = vector.shape_cast %55 : vector<64xf32> to vector<64x1xf32>
    %cst_27 = arith.constant 0.000000e+00 : f32
    %cst_28 = arith.constant 1.000000e+00 : f32
    %57 = vector.broadcast %cst_27 : f32 to vector<64x1xf32>
    %58 = arith.maximumf %57, %56 : vector<64x1xf32>
    %59 = vector.broadcast %cst_28 : f32 to vector<64x1xf32>
    %60 = arith.minimumf %59, %58 : vector<64x1xf32>
    %61 = vector.broadcast %60 : vector<64x1xf32> to vector<64x128xf32>
    %62 = arith.mulf %43, %61 : vector<64x128xf32>
    %c0_29 = arith.constant 0 : index
    %c0_30 = arith.constant 0 : index
    %63 = vector.load %arg9[%c0_29, %c0_30] : memref<128x128xf32, #tpu.memory_space<vmem>>, vector<128x128xf32>
    %cst_31 = arith.constant dense<0.000000e+00> : vector<64x128xf32>
    %64 = tpu.matmul %62, %63, %cst_31 {dimension_numbers = #tpu.dot_dimension_numbers<[1], [0], [0], [1], [0, 0, 1, 1], [], []>} : vector<64x128xf32>, vector<128x128xf32>, vector<64x128xf32> -> vector<64x128xf32>
    %c0_32 = arith.constant 0 : index
    %c0_33 = arith.constant 0 : index
    %65 = vector.load %arg10[%c0_32, %c0_33] : memref<256x64xf32, #tpu.memory_space<vmem>>, vector<256x64xf32>
    %cst_34 = arith.constant dense<0.000000e+00> : vector<256x128xf32>
    %66 = tpu.matmul %65, %64, %cst_34 {dimension_numbers = #tpu.dot_dimension_numbers<[1], [0], [0], [1], [0, 0, 1, 1], [], []>} : vector<256x64xf32>, vector<64x128xf32>, vector<256x128xf32> -> vector<256x128xf32>
    %c0_35 = arith.constant 0 : index
    %c0_36 = arith.constant 0 : index
    %67 = vector.load %arg11[%c0_35, %c0_36] : memref<128x128xf32, #tpu.memory_space<vmem>>, vector<128x128xf32>
    %cst_37 = arith.constant dense<0.000000e+00> : vector<256x128xf32>
    %68 = tpu.matmul %66, %67, %cst_37 {dimension_numbers = #tpu.dot_dimension_numbers<[1], [0], [0], [1], [0, 0, 1, 1], [], []>} : vector<256x128xf32>, vector<128x128xf32>, vector<256x128xf32> -> vector<256x128xf32>
    %c0_38 = arith.constant 0 : index
    %c0_39 = arith.constant 0 : index
    %69 = vector.load %arg12[%c0_38, %c0_39] : memref<1x128xf32, #tpu.memory_space<vmem>>, vector<1x128xf32>
    %70 = vector.broadcast %69 : vector<1x128xf32> to vector<256x128xf32>
    %71 = arith.addf %68, %70 : vector<256x128xf32>
    %c0_40 = arith.constant 0 : index
    %c0_41 = arith.constant 0 : index
    %c0_42 = arith.constant 0 : index
    %72 = vector.load %arg13[%c0_40, %c0_41, %c0_42] : memref<1x256x128xf32, #tpu.memory_space<vmem>>, vector<1x256x128xf32>
    %73 = vector.shape_cast %72 : vector<1x256x128xf32> to vector<256x128xf32>
    %74 = vector.shape_cast %71 : vector<256x128xf32> to vector<1x256x128xf32>
    tpu.vector_store %arg13[%c0_40, %c0_41, %c0_42], %74 {strides = array<i32>} : memref<1x256x128xf32, #tpu.memory_space<vmem>>, vector<1x256x128xf32>,
    return
  }
  func.func @transform_0(%arg0: i32) -> (i32, i32, i32) {
    %c0_i32 = arith.constant 0 : i32
    %c0_i32_0 = arith.constant 0 : i32
    %c0_i32_1 = arith.constant 0 : i32
    return %arg0, %c0_i32, %c0_i32_0 : i32, i32, i32
  }
  func.func @transform_1(%arg0: i32) -> (i32, i32) {
    %c0_i32 = arith.constant 0 : i32
    %c0_i32_0 = arith.constant 0 : i32
    %c0_i32_1 = arith.constant 0 : i32
    return %c0_i32, %c0_i32_0 : i32, i32
  }
  func.func @transform_2(%arg0: i32) -> (i32, i32) {
    %c0_i32 = arith.constant 0 : i32
    %c0_i32_0 = arith.constant 0 : i32
    %c0_i32_1 = arith.constant 0 : i32
    return %c0_i32, %c0_i32_0 : i32, i32
  }
  func.func @transform_3(%arg0: i32) -> (i32, i32) {
    %c0_i32 = arith.constant 0 : i32
    %c0_i32_0 = arith.constant 0 : i32
    %c0_i32_1 = arith.constant 0 : i32
    return %c0_i32, %c0_i32_0 : i32, i32
  }
  func.func @transform_4(%arg0: i32) -> (i32, i32) {
    %c0_i32 = arith.constant 0 : i32
    %c0_i32_0 = arith.constant 0 : i32
    %c0_i32_1 = arith.constant 0 : i32
    return %c0_i32, %c0_i32_0 : i32, i32
  }
  func.func @transform_5(%arg0: i32) -> (i32, i32) {
    %c0_i32 = arith.constant 0 : i32
    %c0_i32_0 = arith.constant 0 : i32
    %c0_i32_1 = arith.constant 0 : i32
    return %c0_i32, %c0_i32_0 : i32, i32
  }
  func.func @transform_6(%arg0: i32) -> (i32, i32) {
    %c0_i32 = arith.constant 0 : i32
    %c0_i32_0 = arith.constant 0 : i32
    %c0_i32_1 = arith.constant 0 : i32
    return %c0_i32, %c0_i32_0 : i32, i32
  }
  func.func @transform_7(%arg0: i32) -> (i32, i32) {
    %c0_i32 = arith.constant 0 : i32
    %c0_i32_0 = arith.constant 0 : i32
    %c0_i32_1 = arith.constant 0 : i32
    return %c0_i32, %c0_i32_0 : i32, i32
  }
  func.func @transform_8(%arg0: i32) -> (i32, i32) {
    %c0_i32 = arith.constant 0 : i32
    %c0_i32_0 = arith.constant 0 : i32
    %c0_i32_1 = arith.constant 0 : i32
    return %c0_i32, %c0_i32_0 : i32, i32
  }
  func.func @transform_9(%arg0: i32) -> (i32, i32) {
    %c0_i32 = arith.constant 0 : i32
    %c0_i32_0 = arith.constant 0 : i32
    %c0_i32_1 = arith.constant 0 : i32
    return %c0_i32, %c0_i32_0 : i32, i32
  }
  func.func @transform_10(%arg0: i32) -> (i32, i32) {
    %c0_i32 = arith.constant 0 : i32
    %c0_i32_0 = arith.constant 0 : i32
    %c0_i32_1 = arith.constant 0 : i32
    return %c0_i32, %c0_i32_0 : i32, i32
  }
  func.func @transform_11(%arg0: i32) -> (i32, i32) {
    %c0_i32 = arith.constant 0 : i32
    %c0_i32_0 = arith.constant 0 : i32
    %c0_i32_1 = arith.constant 0 : i32
    return %c0_i32, %c0_i32_0 : i32, i32
  }
  func.func @transform_12(%arg0: i32) -> (i32, i32, i32) {
    %c0_i32 = arith.constant 0 : i32
    %c0_i32_0 = arith.constant 0 : i32
    %c0_i32_1 = arith.constant 0 : i32
    return %arg0, %c0_i32, %c0_i32_0 : i32, i32, i32
  }
}

</mosaic_0001>

<llo_original>
// kernel: tpu_custom_call.1
$region0: #{tpu_custom_call.1}
  #allocation0 [shape = 'u32[]', space=smem, size = 0x4, offset = 0x4, fixed_abs, tag = 'smem constant byte address 0x4 - core index']
  #allocation1 [shape = 'u32[144,128]{1,0:T(1,128)}', space=vmem, size = 0x12000, scoped, tag = 'internal scratch']
  %s0 = inlined_call_operand.vmem [shape: f32[2,64,4], index: 0, kind: input, shape index: {}]
  %s1 = inlined_call_operand.vmem [shape: f32[4,64], index: 1, kind: input, shape index: {}]
  %s2 = inlined_call_operand.vmem [shape: f32[1,64], index: 2, kind: input, shape index: {}]
  %s3 = inlined_call_operand.vmem [shape: f32[1,64], index: 3, kind: input, shape index: {}]
  %s4 = inlined_call_operand.vmem [shape: f32[1,64], index: 4, kind: input, shape index: {}]
  %s5 = inlined_call_operand.vmem [shape: f32[64,128], index: 5, kind: input, shape index: {}]
  %s6 = inlined_call_operand.vmem [shape: f32[1,128], index: 6, kind: input, shape index: {}]
  %s7 = inlined_call_operand.vmem [shape: f32[1,128], index: 7, kind: input, shape index: {}]
  %s8 = inlined_call_operand.vmem [shape: f32[128,128], index: 8, kind: input, shape index: {}]
  %s9 = inlined_call_operand.vmem [shape: f32[256,64], index: 9, kind: input, shape index: {}]
  %s10 = inlined_call_operand.vmem [shape: f32[128,128], index: 10, kind: input, shape index: {}]
  %s11 = inlined_call_operand.vmem [shape: f32[1,128], index: 11, kind: input, shape index: {}]
  %s12 = inlined_call_operand.hbm [shape: f32[2,256,128], index: 12, kind: output, shape index: {}]
  %s13 = sld [smem:[#allocation0]]
  $region81: #{tpu_custom_call.1} parent=0
    _
  %s15 = ssub.s32 1, %s13
  %s16 = scalar_select 0, %s15, %s13
  $region1: #{tpu_custom_call.1} parent=0
    #allocation2 [shape = 'u8[262144]{0}', space=vmem, size = 0x40000, scoped, tag = 'output window, operand 0']
    #allocation3 [shape = 's32[2]{0}', space=sflag, size = 0x8, scoped, tag = 'scoped memory for tpu_custom_call.1']
    %17 = vsyncpa [#allocation3], 0
    %s18 = scalar_lea.sflag [#allocation3], 1
    %19 = vsyncpa %s18, 0
    loop: start=0, step=1, limit=4
    $region2: #{tpu_custom_call.1} parent=1 // loop_pre_header
      _
    $region3: #{tpu_custom_call.1} parent=1 // loop_header
      %s21 = sphi 0, %s25
      %p22 = scmp.ge.s32.totalorder %s21, 4
      %s31 = sphi 0, %s33
      %s34 = sphi 0, %s31
      %s35 = sphi 0, %s34
      %s51 = sphi 0, %s35
      %s55 = sphi 0, %s55
      %s57 = sphi 0, %s55
      %s58 = sphi 0, %s57
      %s72 = sphi 0, %s58
      %s76 = sphi 0, %s76
      %s78 = sphi 0, %s76
      %s79 = sphi 0, %s78
      %s93 = sphi 0, %s79
      %s97 = sphi 0, %s97
      %s99 = sphi 0, %s97
      %s100 = sphi 0, %s99
      %s114 = sphi 0, %s100
      %s118 = sphi 0, %s118
      %s120 = sphi 0, %s118
      %s121 = sphi 0, %s120
      %s135 = sphi 0, %s121
      %s139 = sphi 0, %s139
      %s141 = sphi 0, %s139
      %s142 = sphi 0, %s141
      %s156 = sphi 0, %s142
      %s160 = sphi 0, %s160
      %s162 = sphi 0, %s160
      %s163 = sphi 0, %s162
      %s177 = sphi 0, %s163
      %s181 = sphi 0, %s181
      %s183 = sphi 0, %s181
      %s184 = sphi 0, %s183
      %s198 = sphi 0, %s184
      %s202 = sphi 0, %s202
      %s204 = sphi 0, %s202
      %s205 = sphi 0, %s204
      %s219 = sphi 0, %s205
      %s223 = sphi 0, %s223
      %s225 = sphi 0, %s223
      %s226 = sphi 0, %s225
      %s240 = sphi 0, %s226
      %s244 = sphi 0, %s244
      %s246 = sphi 0, %s244
      %s247 = sphi 0, %s246
      %s261 = sphi 0, %s247
      %s265 = sphi 0, %s265
      %s267 = sphi 0, %s265
      %s268 = sphi 0, %s267
      %s282 = sphi 0, %s268
      %s288 = sphi 0, %s290
      %s291 = sphi 0, %s288
      %s292 = sphi 0, %s291
      %s308 = sphi 0, %s292
    $region4: #{tpu_custom_call.1} parent=1 // loop_header_branch
      %24 = sbr.rel (%p22) target = $region8
    $region5: #{tpu_custom_call.1} parent=1 // loop_body
      %s26 = ssub.s32 %s21, 1
      %s27 = ssub.s32 %s21, 2
      %s28 = sadd.s32 %s21, 1
      %s29 = ssub.s32 %s21, %s28
      %p30 = scmp.eq.s32.totalorder %s29, 0
      %s32 = sadd.s32 %s31, 1
      %s33 = scalar_select %p30, %s31, %s32
      %p36 = pneg %p30
      %p37 = scmp.eq.s32.totalorder %s21, 1
      %p38 = por %p36, %p37
      %p39 = scmp.ne.s32.totalorder %s31, %s34
      %p40 = scmp.eq.s32.totalorder %s21, 0
      %p41 = por %p39, %p40
      %p42 = scmp.ne.s32.totalorder %s31, %s34
      %p43 = scmp.eq.s32.totalorder %s26, 1
      %p44 = por %p42, %p43
      %p45 = scmp.ne.s32.totalorder %s34, %s35
      %p46 = scmp.eq.s32.totalorder %s26, 0
      %p47 = por %p45, %p46
      %p48 = scmp.ne.s32.totalorder %s34, %s35
      %p49 = scmp.eq.s32.totalorder %s27, 1
      %p50 = por %p48, %p49
      %p52 = scmp.ne.s32.totalorder %s35, %s51
      %p53 = scmp.eq.s32.totalorder %s27, 0
      %p54 = por %p52, %p53
      %s56 = sadd.s32 %s55, 1
      %p59 = scmp.eq.s32.totalorder %s21, 1
      %p60 = scmp.ne.s32.totalorder %s55, %s57
      %p61 = scmp.eq.s32.totalorder %s21, 0
      %p62 = por %p60, %p61
      %p63 = scmp.ne.s32.totalorder %s55, %s57
      %p64 = scmp.eq.s32.totalorder %s26, 1
      %p65 = por %p63, %p64
      %p66 = scmp.ne.s32.totalorder %s57, %s58
      %p67 = scmp.eq.s32.totalorder %s26, 0
      %p68 = por %p66, %p67
      %p69 = scmp.ne.s32.totalorder %s57, %s58
      %p70 = scmp.eq.s32.totalorder %s27, 1
      %p71 = por %p69, %p70
      %p73 = scmp.ne.s32.totalorder %s58, %s72
      %p74 = scmp.eq.s32.totalorder %s27, 0
      %p75 = por %p73, %p74
      %s77 = sadd.s32 %s76, 1
      %p80 = scmp.eq.s32.totalorder %s21, 1
      %p81 = scmp.ne.s32.totalorder %s76, %s78
      %p82 = scmp.eq.s32.totalorder %s21, 0
      %p83 = por %p81, %p82
      %p84 = scmp.ne.s32.totalorder %s76, %s78
      %p85 = scmp.eq.s32.totalorder %s26, 1
      %p86 = por %p84, %p85
      %p87 = scmp.ne.s32.totalorder %s78, %s79
      %p88 = scmp.eq.s32.totalorder %s26, 0
      %p89 = por %p87, %p88
      %p90 = scmp.ne.s32.totalorder %s78, %s79
      %p91 = scmp.eq.s32.totalorder %s27, 1
      %p92 = por %p90, %p91
      %p94 = scmp.ne.s32.totalorder %s79, %s93
      %p95 = scmp.eq.s32.totalorder %s27, 0
      %p96 = por %p94, %p95
      %s98 = sadd.s32 %s97, 1
      %p101 = scmp.eq.s32.totalorder %s21, 1
      %p102 = scmp.ne.s32.totalorder %s97, %s99
      %p103 = scmp.eq.s32.totalorder %s21, 0
      %p104 = por %p102, %p103
      %p105 = scmp.ne.s32.totalorder %s97, %s99
      %p106 = scmp.eq.s32.totalorder %s26, 1
      %p107 = por %p105, %p106
      %p108 = scmp.ne.s32.totalorder %s99, %s100
      %p109 = scmp.eq.s32.totalorder %s26, 0
      %p110 = por %p108, %p109
      %p111 = scmp.ne.s32.totalorder %s99, %s100
      %p112 = scmp.eq.s32.totalorder %s27, 1
      %p113 = por %p111, %p112
      %p115 = scmp.ne.s32.totalorder %s100, %s114
      %p116 = scmp.eq.s32.totalorder %s27, 0
      %p117 = por %p115, %p116
      %s119 = sadd.s32 %s118, 1
      %p122 = scmp.eq.s32.totalorder %s21, 1
      %p123 = scmp.ne.s32.totalorder %s118, %s120
      %p124 = scmp.eq.s32.totalorder %s21, 0
      %p125 = por %p123, %p124
      %p126 = scmp.ne.s32.totalorder %s118, %s120
      %p127 = scmp.eq.s32.totalorder %s26, 1
      %p128 = por %p126, %p127
      %p129 = scmp.ne.s32.totalorder %s120, %s121
      %p130 = scmp.eq.s32.totalorder %s26, 0
      %p131 = por %p129, %p130
      %p132 = scmp.ne.s32.totalorder %s120, %s121
      %p133 = scmp.eq.s32.totalorder %s27, 1
      %p134 = por %p132, %p133
      %p136 = scmp.ne.s32.totalorder %s121, %s135
      %p137 = scmp.eq.s32.totalorder %s27, 0
      %p138 = por %p136, %p137
      %s140 = sadd.s32 %s139, 1
      %p143 = scmp.eq.s32.totalorder %s21, 1
      %p144 = scmp.ne.s32.totalorder %s139, %s141
      %p145 = scmp.eq.s32.totalorder %s21, 0
      %p146 = por %p144, %p145
      %p147 = scmp.ne.s32.totalorder %s139, %s141
      %p148 = scmp.eq.s32.totalorder %s26, 1
      %p149 = por %p147, %p148
      %p150 = scmp.ne.s32.totalorder %s141, %s142
      %p151 = scmp.eq.s32.totalorder %s26, 0
      %p152 = por %p150, %p151
      %p153 = scmp.ne.s32.totalorder %s141, %s142
      %p154 = scmp.eq.s32.totalorder %s27, 1
      %p155 = por %p153, %p154
      %p157 = scmp.ne.s32.totalorder %s142, %s156
      %p158 = scmp.eq.s32.totalorder %s27, 0
      %p159 = por %p157, %p158
      %s161 = sadd.s32 %s160, 1
      %p164 = scmp.eq.s32.totalorder %s21, 1
      %p165 = scmp.ne.s32.totalorder %s160, %s162
      %p166 = scmp.eq.s32.totalorder %s21, 0
      %p167 = por %p165, %p166
      %p168 = scmp.ne.s32.totalorder %s160, %s162
      %p169 = scmp.eq.s32.totalorder %s26, 1
      %p170 = por %p168, %p169
      %p171 = scmp.ne.s32.totalorder %s162, %s163
      %p172 = scmp.eq.s32.totalorder %s26, 0
      %p173 = por %p171, %p172
      %p174 = scmp.ne.s32.totalorder %s162, %s163
      %p175 = scmp.eq.s32.totalorder %s27, 1
      %p176 = por %p174, %p175
      %p178 = scmp.ne.s32.totalorder %s163, %s177
      %p179 = scmp.eq.s32.totalorder %s27, 0
      %p180 = por %p178, %p179
      %s182 = sadd.s32 %s181, 1
      %p185 = scmp.eq.s32.totalorder %s21, 1
      %p186 = scmp.ne.s32.totalorder %s181, %s183
      %p187 = scmp.eq.s32.totalorder %s21, 0
      %p188 = por %p186, %p187
      %p189 = scmp.ne.s32.totalorder %s181, %s183
      %p190 = scmp.eq.s32.totalorder %s26, 1
      %p191 = por %p189, %p190
      %p192 = scmp.ne.s32.totalorder %s183, %s184
      %p193 = scmp.eq.s32.totalorder %s26, 0
      %p194 = por %p192, %p193
      %p195 = scmp.ne.s32.totalorder %s183, %s184
      %p196 = scmp.eq.s32.totalorder %s27, 1
      %p197 = por %p195, %p196
      %p199 = scmp.ne.s32.totalorder %s184, %s198
      %p200 = scmp.eq.s32.totalorder %s27, 0
      %p201 = por %p199, %p200
      %s203 = sadd.s32 %s202, 1
      %p206 = scmp.eq.s32.totalorder %s21, 1
      %p207 = scmp.ne.s32.totalorder %s202, %s204
      %p208 = scmp.eq.s32.totalorder %s21, 0
      %p209 = por %p207, %p208
      %p210 = scmp.ne.s32.totalorder %s202, %s204
      %p211 = scmp.eq.s32.totalorder %s26, 1
      %p212 = por %p210, %p211
      %p213 = scmp.ne.s32.totalorder %s204, %s205
      %p214 = scmp.eq.s32.totalorder %s26, 0
      %p215 = por %p213, %p214
      %p216 = scmp.ne.s32.totalorder %s204, %s205
      %p217 = scmp.eq.s32.totalorder %s27, 1
      %p218 = por %p216, %p217
      %p220 = scmp.ne.s32.totalorder %s205, %s219
      %p221 = scmp.eq.s32.totalorder %s27, 0
      %p222 = por %p220, %p221
      %s224 = sadd.s32 %s223, 1
      %p227 = scmp.eq.s32.totalorder %s21, 1
      %p228 = scmp.ne.s32.totalorder %s223, %s225
      %p229 = scmp.eq.s32.totalorder %s21, 0
      %p230 = por %p228, %p229
      %p231 = scmp.ne.s32.totalorder %s223, %s225
      %p232 = scmp.eq.s32.totalorder %s26, 1
      %p233 = por %p231, %p232
      %p234 = scmp.ne.s32.totalorder %s225, %s226
      %p235 = scmp.eq.s32.totalorder %s26, 0
      %p236 = por %p234, %p235
      %p237 = scmp.ne.s32.totalorder %s225, %s226
      %p238 = scmp.eq.s32.totalorder %s27, 1
      %p239 = por %p237, %p238
      %p241 = scmp.ne.s32.totalorder %s226, %s240
      %p242 = scmp.eq.s32.totalorder %s27, 0
      %p243 = por %p241, %p242
      %s245 = sadd.s32 %s244, 1
      %p248 = scmp.eq.s32.totalorder %s21, 1
      %p249 = scmp.ne.s32.totalorder %s244, %s246
      %p250 = scmp.eq.s32.totalorder %s21, 0
      %p251 = por %p249, %p250
      %p252 = scmp.ne.s32.totalorder %s244, %s246
      %p253 = scmp.eq.s32.totalorder %s26, 1
      %p254 = por %p252, %p253
      %p255 = scmp.ne.s32.totalorder %s246, %s247
      %p256 = scmp.eq.s32.totalorder %s26, 0
      %p257 = por %p255, %p256
      %p258 = scmp.ne.s32.totalorder %s246, %s247
      %p259 = scmp.eq.s32.totalorder %s27, 1
      %p260 = por %p258, %p259
      %p262 = scmp.ne.s32.totalorder %s247, %s261
      %p263 = scmp.eq.s32.totalorder %s27, 0
      %p264 = por %p262, %p263
      %s266 = sadd.s32 %s265, 1
      %p269 = scmp.eq.s32.totalorder %s21, 1
      %p270 = scmp.ne.s32.totalorder %s265, %s267
      %p271 = scmp.eq.s32.totalorder %s21, 0
      %p272 = por %p270, %p271
      %p273 = scmp.ne.s32.totalorder %s265, %s267
      %p274 = scmp.eq.s32.totalorder %s26, 1
      %p275 = por %p273, %p274
      %p276 = scmp.ne.s32.totalorder %s267, %s268
      %p277 = scmp.eq.s32.totalorder %s26, 0
      %p278 = por %p276, %p277
      %p279 = scmp.ne.s32.totalorder %s267, %s268
      %p280 = scmp.eq.s32.totalorder %s27, 1
      %p281 = por %p279, %p280
      %p283 = scmp.ne.s32.totalorder %s268, %s282
      %p284 = scmp.eq.s32.totalorder %s27, 0
      %p285 = por %p283, %p284
      %s286 = ssub.s32 %s21, %s28
      %p287 = scmp.eq.s32.totalorder %s286, 0
      %s289 = sadd.s32 %s288, 1
      %s290 = scalar_select %p287, %s288, %s289
      %p293 = pneg %p287
      %p294 = scmp.eq.s32.totalorder %s21, 1
      %p295 = por %p293, %p294
      %p296 = scmp.ne.s32.totalorder %s288, %s291
      %p297 = scmp.eq.s32.totalorder %s21, 0
      %p298 = por %p296, %p297
      %p299 = scmp.ne.s32.totalorder %s288, %s291
      %p300 = scmp.eq.s32.totalorder %s26, 1
      %p301 = por %p299, %p300
      %p302 = scmp.ne.s32.totalorder %s291, %s292
      %p303 = scmp.eq.s32.totalorder %s26, 0
      %p304 = por %p302, %p303
      %p305 = scmp.ne.s32.totalorder %s291, %s292
      %p306 = scmp.eq.s32.totalorder %s27, 1
      %p307 = por %p305, %p306
      %p309 = scmp.ne.s32.totalorder %s292, %s308
      %p310 = scmp.eq.s32.totalorder %s27, 0
      %p311 = por %p309, %p310
      %p312 = scmp.le.s32.totalorder 1, %s21
      %p313 = scmp.lt.s32.totalorder %s21, 3
      %p314 = pnand %p312, %p313
      %p315 = pneg %p314
      // Predicated region
      $region9: #{tpu_custom_call.1} parent=5 // pred_check
        _
      $region10: #{tpu_custom_call.1} parent=5 // pred_check_branch
        %317 = sbr.rel (%p314) target = $region12
      $region11: #{tpu_custom_call.1} parent=5 // pred_region
        %s318 = ssub.s32 %s21, 1
        // Predicated region
        $region13: #{tpu_custom_call.1} parent=11 // pred_check
          %p319 = pneg %p68
        $region14: #{tpu_custom_call.1} parent=11 // pred_check_branch
          %321 = sbr.rel (%p319) target = $region16
        $region15: #{tpu_custom_call.1} parent=11 // pred_region
          _
        $region16: #{tpu_custom_call.1} parent=11 // pred_fallthru
          _
        // Predicated region
        $region17: #{tpu_custom_call.1} parent=11 // pred_check
          %p322 = pneg %p89
        $region18: #{tpu_custom_call.1} parent=11 // pred_check_branch
          %324 = sbr.rel (%p322) target = $region20
        $region19: #{tpu_custom_call.1} parent=11 // pred_region
          _
        $region20: #{tpu_custom_call.1} parent=11 // pred_fallthru
          _
        // Predicated region
        $region21: #{tpu_custom_call.1} parent=11 // pred_check
          %p325 = pneg %p110
        $region22: #{tpu_custom_call.1} parent=11 // pred_check_branch
          %327 = sbr.rel (%p325) target = $region24
        $region23: #{tpu_custom_call.1} parent=11 // pred_region
          _
        $region24: #{tpu_custom_call.1} parent=11 // pred_fallthru
          _
        // Predicated region
        $region25: #{tpu_custom_call.1} parent=11 // pred_check
          %p328 = pneg %p131
        $region26: #{tpu_custom_call.1} parent=11 // pred_check_branch
          %330 = sbr.rel (%p328) target = $region28
        $region27: #{tpu_custom_call.1} parent=11 // pred_region
          _
        $region28: #{tpu_custom_call.1} parent=11 // pred_fallthru
          _
        // Predicated region
        $region29: #{tpu_custom_call.1} parent=11 // pred_check
          %p331 = pneg %p152
        $region30: #{tpu_custom_call.1} parent=11 // pred_check_branch
          %333 = sbr.rel (%p331) target = $region32
        $region31: #{tpu_custom_call.1} parent=11 // pred_region
          _
        $region32: #{tpu_custom_call.1} parent=11 // pred_fallthru
          _
        // Predicated region
        $region33: #{tpu_custom_call.1} parent=11 // pred_check
          %p334 = pneg %p173
        $region34: #{tpu_custom_call.1} parent=11 // pred_check_branch
          %336 = sbr.rel (%p334) target = $region36
        $region35: #{tpu_custom_call.1} parent=11 // pred_region
          _
        $region36: #{tpu_custom_call.1} parent=11 // pred_fallthru
          _
        // Predicated region
        $region37: #{tpu_custom_call.1} parent=11 // pred_check
          %p337 = pneg %p194
        $region38: #{tpu_custom_call.1} parent=11 // pred_check_branch
          %339 = sbr.rel (%p337) target = $region40
        $region39: #{tpu_custom_call.1} parent=11 // pred_region
          _
        $region40: #{tpu_custom_call.1} parent=11 // pred_fallthru
          _
        // Predicated region
        $region41: #{tpu_custom_call.1} parent=11 // pred_check
          %p340 = pneg %p215
        $region42: #{tpu_custom_call.1} parent=11 // pred_check_branch
          %342 = sbr.rel (%p340) target = $region44
        $region43: #{tpu_custom_call.1} parent=11 // pred_region
          _
        $region44: #{tpu_custom_call.1} parent=11 // pred_fallthru
          _
        // Predicated region
        $region45: #{tpu_custom_call.1} parent=11 // pred_check
          %p343 = pneg %p236
        $region46: #{tpu_custom_call.1} parent=11 // pred_check_branch
          %345 = sbr.rel (%p343) target = $region48
        $region47: #{tpu_custom_call.1} parent=11 // pred_region
          _
        $region48: #{tpu_custom_call.1} parent=11 // pred_fallthru
          _
        // Predicated region
        $region49: #{tpu_custom_call.1} parent=11 // pred_check
          %p346 = pneg %p257
        $region50: #{tpu_custom_call.1} parent=11 // pred_check_branch
          %348 = sbr.rel (%p346) target = $region52
        $region51: #{tpu_custom_call.1} parent=11 // pred_region
          _
        $region52: #{tpu_custom_call.1} parent=11 // pred_fallthru
          _
        // Predicated region
        $region53: #{tpu_custom_call.1} parent=11 // pred_check
          %p349 = pneg %p278
        $region54: #{tpu_custom_call.1} parent=11 // pred_check_branch
          %351 = sbr.rel (%p349) target = $region56
        $region55: #{tpu_custom_call.1} parent=11 // pred_region
          _
        $region56: #{tpu_custom_call.1} parent=11 // pred_fallthru
          _
      $region12: #{tpu_custom_call.1} parent=5 // pred_fallthru
        _
      %p352 = scmp.lt.s32.totalorder %s21, 2
      // Predicated region
      $region57: #{tpu_custom_call.1} parent=5 // pred_check
        %p353 = pneg %p352
      $region58: #{tpu_custom_call.1} parent=5 // pred_check_branch
        %355 = sbr.rel (%p353) target = $region60
      $region59: #{tpu_custom_call.1} parent=5 // pred_region
        // Predicated region
        $region61: #{tpu_custom_call.1} parent=59 // pred_check
          %p356 = pneg %p41
        $region62: #{tpu_custom_call.1} parent=59 // pred_check_branch
          %358 = sbr.rel (%p356) target = $region64
        $region63: #{tpu_custom_call.1} parent=59 // pred_region
          %p359 = scmp.lt.s32.totalorder %s21, 1
          %s360 = scalar_select %p359, %s21, 1
          %s361 = smul.addr %s360, 8
          %s362 = smul.addr %s361, 8
          %s363 = scalar_lea.vmem %s0, %s362
        $region64: #{tpu_custom_call.1} parent=59 // pred_fallthru
          _
      $region60: #{tpu_custom_call.1} parent=5 // pred_fallthru
        _
      %p364 = scmp.le.s32.totalorder 1, %s21
      %p365 = scmp.lt.s32.totalorder %s21, 3
      %p366 = pnand %p364, %p365
      %p367 = pneg %p366
      // Predicated region
      $region65: #{tpu_custom_call.1} parent=5 // pred_check
        _
      $region66: #{tpu_custom_call.1} parent=5 // pred_check_branch
        %369 = sbr.rel (%p366) target = $region68
      $region67: #{tpu_custom_call.1} parent=5 // pred_region
        %s370 = ssub.s32 %s21, 1
        %p371 = scmp.lt.s32.totalorder %s26, 1
        %s372 = scalar_select %p371, %s26, 1
        %s373 = smul.addr %s372, 8
        %s374 = smul.addr %s373, 8
        %s375 = scalar_lea.vmem %s0, %s374
        %p376 = pneg %p47
        %p377 = pneg %p44
        %p378 = pneg %p68
        %p379 = pneg %p65
        %p380 = pneg %p89
        %p381 = pneg %p86
        %p382 = pneg %p110
        %p383 = pneg %p107
        %p384 = pneg %p131
        %p385 = pneg %p128
        %p386 = pneg %p152
        %p387 = pneg %p149
        %p388 = pneg %p173
        %p389 = pneg %p170
        %p390 = pneg %p194
        %p391 = pneg %p191
        %p392 = pneg %p215
        %p393 = pneg %p212
        %p394 = pneg %p236
        %p395 = pneg %p233
        %p396 = pneg %p257
        %p397 = pneg %p254
        %p398 = pneg %p278
        %p399 = pneg %p275
        %p400 = pneg %p304
        %p401 = pneg %p301
        %s402 = sand.u32 %s291, 1
        %s403 = scalar_lea.sflag [#allocation3], %s402
        %s404 = sand.u32 %s291, 1
        %s405 = smul.addr %s404, 256
        %s406 = scalar_lea.vmem [#allocation2], %s405
        %p407 = scmp.lt.s32.totalorder %s26, 1
        %s408 = scalar_select %p407, %s26, 1
        %s409 = smul.addr %s408, 8
        %s410 = smul.addr %s409, 8
        %s411 = scalar_lea.vmem %s0, %s410
        %v412 = vld [vmem:[%s411] sm:$0xff]
        %v413 = vld [vmem:[%s411 + $0x8] sm:$0xff]
        %v414 = vld [vmem:[%s411 + $0x10] sm:$0xff]
        %v415 = vld [vmem:[%s411 + $0x18] sm:$0xff]
        %v416 = vld [vmem:[%s411 + $0x20] sm:$0xff]
        %v417 = vld [vmem:[%s411 + $0x28] sm:$0xff]
        %v418 = vld [vmem:[%s411 + $0x30] sm:$0xff]
        %v419 = vld [vmem:[%s411 + $0x38] sm:$0xff]
        %v420 = vld [vmem:[%s1] sm:$0xf]
        %v421 = vld [vmem:[%s2] sm:$0x1]
        %v423 = vlaneseq
        %v424 = vshrl.u32 %v423, 7
        %v425 = vsub.s32 0, %v424
        %v426 = vrot.slane %v421, %v425
        %vm428 = vcmask 31744
        %v430 = vsel %vm428, %v412, 0
        %v433 = vsel %vm428, %v413, 0
        %v436 = vsel %vm428, %v414, 0
        %v439 = vsel %vm428, %v415, 0
        %v442 = vsel %vm428, %v416, 0
        %v445 = vsel %vm428, %v417, 0
        %v448 = vsel %vm428, %v418, 0
        %v451 = vsel %vm428, %v419, 0
        %vm453 = vcmask 1043456
        %v455 = vsel %vm453, %v420, 0
        %457 = vmatprep.subr.mxu0 0.0
        %458 = vmatpush1.msra.mxu0 0.0
        %459 = vmatprep.subr.mxu0 0.0
        %460 = vmatpush1.msra.mxu0 0.0
        %461 = vmatprep.subr.mxu0 0.0
        %462 = vmatpush1.msra.mxu0 0.0
        %463 = vmatprep.subr.mxu0 0.0
        %464 = vmatpush1.msra.mxu0 0.0
        %465 = vmatprep.subr.mxu0 0.0
        %466 = vmatpush1.msra.mxu0 0.0
        %467 = vmatprep.subr.mxu0 0.0
        %468 = vmatpush1.msra.mxu0 0.0
        %469 = vmatprep.subr.mxu0 0.0
        %470 = vmatpush1.msra.mxu0 0.0
        %471 = vmatprep.subr.mxu0 0.0
        %472 = vmatpush1.msra.mxu0 0.0
        %473 = vmatprep.subr.mxu0 0.0
        %474 = vmatpush1.msra.mxu0 0.0
        %475 = vmatprep.subr.mxu0 0.0
        %476 = vmatpush1.msra.mxu0 0.0
        %477 = vmatprep.subr.mxu0 0.0
        %478 = vmatpush1.msra.mxu0 0.0
        %479 = vmatprep.subr.mxu0 0.0
        %480 = vmatpush1.msra.mxu0 0.0
        %481 = vmatprep.subr.mxu0 0.0
        %482 = vmatpush1.msra.mxu0 0.0
        %483 = vmatprep.subr.mxu0 0.0
        %484 = vmatpush1.msra.mxu0 0.0
        %485 = vmatprep.subr.mxu0 0.0
        %486 = vmatpush1.msra.mxu0 0.0
        %487 = vmatprep.subr.mxu0 0.0
        %488 = vmatpush1.msra.mxu0 %v455
        %489 = vmatprep.subr.mxu0 0.0
        %490 = vmatpush2.msra.mxu0 0.0
        %491 = vmatprep.subr.mxu0 0.0
        %492 = vmatpush2.msra.mxu0 0.0
        %493 = vmatprep.subr.mxu0 0.0
        %494 = vmatpush2.msra.mxu0 0.0
        %495 = vmatprep.subr.mxu0 0.0
        %496 = vmatpush2.msra.mxu0 0.0
        %497 = vmatprep.subr.mxu0 0.0
        %498 = vmatpush2.msra.mxu0 0.0
        %499 = vmatprep.subr.mxu0 0.0
        %500 = vmatpush2.msra.mxu0 0.0
        %501 = vmatprep.subr.mxu0 0.0
        %502 = vmatpush2.msra.mxu0 0.0
        %503 = vmatprep.subr.mxu0 0.0
        %504 = vmatpush2.msra.mxu0 0.0
        %505 = vmatprep.subr.mxu0 0.0
        %506 = vmatpush2.msra.mxu0 0.0
        %507 = vmatprep.subr.mxu0 0.0
        %508 = vmatpush2.msra.mxu0 0.0
        %509 = vmatprep.subr.mxu0 0.0
        %510 = vmatpush2.msra.mxu0 0.0
        %511 = vmatprep.subr.mxu0 0.0
        %512 = vmatpush2.msra.mxu0 0.0
        %513 = vmatprep.subr.mxu0 0.0
        %514 = vmatpush2.msra.mxu0 0.0
        %515 = vmatprep.subr.mxu0 0.0
        %516 = vmatpush2.msra.mxu0 0.0
        %517 = vmatprep.subr.mxu0 0.0
        %518 = vmatpush2.msra.mxu0 0.0
        %519 = vmatprep.subr.mxu0 0.0
        %520 = vmatpush2.msra.mxu0 0.0
        %521 = vmatprep.mubr.f32.mxu0 0.0
        %522 = vmatmul.mubr.f32.gmra.mxu0 %v430
        %v523 = vpop.f32.mrf.mxu0
        %v524 = vadd.f32 %v426, %v523
        %v525 = vpop.f32.mrf.mxu0
        %526 = vmatprep.mubr.f32.mxu0 0.0
        %527 = vmatmul.mubr.f32.gmra.mxu0 %v433
        %v528 = vpop.f32.mrf.mxu0
        %v529 = vadd.f32 %v426, %v528
        %v530 = vpop.f32.mrf.mxu0
        %531 = vmatprep.mubr.f32.mxu0 0.0
        %532 = vmatmul.mubr.f32.gmra.mxu0 %v436
        %v533 = vpop.f32.mrf.mxu0
        %v534 = vadd.f32 %v426, %v533
        %v535 = vpop.f32.mrf.mxu0
        %536 = vmatprep.mubr.f32.mxu0 0.0
        %537 = vmatmul.mubr.f32.gmra.mxu0 %v439
        %v538 = vpop.f32.mrf.mxu0
        %v539 = vadd.f32 %v426, %v538
        %v540 = vpop.f32.mrf.mxu0
        %541 = vmatprep.mubr.f32.mxu0 0.0
        %542 = vmatmul.mubr.f32.gmra.mxu0 %v442
        %v543 = vpop.f32.mrf.mxu0
        %v544 = vadd.f32 %v426, %v543
        %v545 = vpop.f32.mrf.mxu0
        %546 = vmatprep.mubr.f32.mxu0 0.0
        %547 = vmatmul.mubr.f32.gmra.mxu0 %v445
        %v548 = vpop.f32.mrf.mxu0
        %v549 = vadd.f32 %v426, %v548
        %v550 = vpop.f32.mrf.mxu0
        %551 = vmatprep.mubr.f32.mxu0 0.0
        %552 = vmatmul.mubr.f32.gmra.mxu0 %v448
        %v553 = vpop.f32.mrf.mxu0
        %v554 = vadd.f32 %v426, %v553
        %v555 = vpop.f32.mrf.mxu0
        %556 = vmatprep.mubr.f32.mxu0 0.0
        %557 = vmatmul.mubr.f32.gmra.mxu0 %v451
        %v558 = vpop.f32.mrf.mxu0
        %v559 = vadd.f32 %v426, %v558
        %v560 = vpop.f32.mrf.mxu0
        %561 = vdwg.mxu0
        %vm562 = vcmask 523264
        %v563 = vsel %vm562, %v524, 0.0
        %564 = vadd.xlane.f32.xlu0 %v563
        %v565 = vpop.xlane.xlu0 %564
        %v566 = vsel %vm562, %v529, 0.0
        %567 = vadd.xlane.f32.xlu0 %v566
        %v568 = vpop.xlane.xlu0 %567
        %v569 = vsel %vm562, %v534, 0.0
        %570 = vadd.xlane.f32.xlu0 %v569
        %v571 = vpop.xlane.xlu0 %570
        %v572 = vsel %vm562, %v539, 0.0
        %573 = vadd.xlane.f32.xlu0 %v572
        %v574 = vpop.xlane.xlu0 %573
        %v575 = vsel %vm562, %v544, 0.0
        %576 = vadd.xlane.f32.xlu0 %v575
        %v577 = vpop.xlane.xlu0 %576
        %v578 = vsel %vm562, %v549, 0.0
        %579 = vadd.xlane.f32.xlu0 %v578
        %v580 = vpop.xlane.xlu0 %579
        %v581 = vsel %vm562, %v554, 0.0
        %582 = vadd.xlane.f32.xlu0 %v581
        %v583 = vpop.xlane.xlu0 %582
        %v584 = vsel %vm562, %v559, 0.0
        %585 = vadd.xlane.f32.xlu0 %v584
        %v586 = vpop.xlane.xlu0 %585
        %v587 = vrcp.pop 64.0
        %v588 = vmul.f32 %v565, %v587
        %v589 = vmul.f32 %v568, %v587
        %v590 = vmul.f32 %v571, %v587
        %v591 = vmul.f32 %v574, %v587
        %v592 = vmul.f32 %v577, %v587
        %v593 = vmul.f32 %v580, %v587
        %v594 = vmul.f32 %v583, %v587
        %v595 = vmul.f32 %v586, %v587
        %v596 = vsub.f32 %v524, %v588
        %v597 = vsub.f32 %v529, %v589
        %v598 = vsub.f32 %v534, %v590
        %v599 = vsub.f32 %v539, %v591
        %v600 = vsub.f32 %v544, %v592
        %v601 = vsub.f32 %v549, %v593
        %v602 = vsub.f32 %v554, %v594
        %v603 = vsub.f32 %v559, %v595
        %v604 = vmul.f32 %v596, %v596
        %v605 = vmul.f32 %v597, %v597
        %v606 = vmul.f32 %v598, %v598
        %v607 = vmul.f32 %v599, %v599
        %v608 = vmul.f32 %v600, %v600
        %v609 = vmul.f32 %v601, %v601
        %v610 = vmul.f32 %v602, %v602
        %v611 = vmul.f32 %v603, %v603
        %v612 = vsel %vm562, %v604, 0.0
        %613 = vadd.xlane.f32.xlu0 %v612
        %v614 = vpop.xlane.xlu0 %613
        %v615 = vsel %vm562, %v605, 0.0
        %616 = vadd.xlane.f32.xlu0 %v615
        %v617 = vpop.xlane.xlu0 %616
        %v618 = vsel %vm562, %v606, 0.0
        %619 = vadd.xlane.f32.xlu0 %v618
        %v620 = vpop.xlane.xlu0 %619
        %v621 = vsel %vm562, %v607, 0.0
        %622 = vadd.xlane.f32.xlu0 %v621
        %v623 = vpop.xlane.xlu0 %622
        %v624 = vsel %vm562, %v608, 0.0
        %625 = vadd.xlane.f32.xlu0 %v624
        %v626 = vpop.xlane.xlu0 %625
        %v627 = vsel %vm562, %v609, 0.0
        %628 = vadd.xlane.f32.xlu0 %v627
        %v629 = vpop.xlane.xlu0 %628
        %v630 = vsel %vm562, %v610, 0.0
        %631 = vadd.xlane.f32.xlu0 %v630
        %v632 = vpop.xlane.xlu0 %631
        %v633 = vsel %vm562, %v611, 0.0
        %634 = vadd.xlane.f32.xlu0 %v633
        %v635 = vpop.xlane.xlu0 %634
        %v636 = vmul.f32 %v614, %v587
        %v637 = vmul.f32 %v617, %v587
        %v638 = vmul.f32 %v620, %v587
        %v639 = vmul.f32 %v623, %v587
        %v640 = vmul.f32 %v626, %v587
        %v641 = vmul.f32 %v629, %v587
        %v642 = vmul.f32 %v632, %v587
        %v643 = vmul.f32 %v635, %v587
        %v644 = vadd.f32 %v636, 1e-05
        %v645 = vadd.f32 %v637, 1e-05
        %v646 = vadd.f32 %v638, 1e-05
        %v647 = vadd.f32 %v639, 1e-05
        %v648 = vadd.f32 %v640, 1e-05
        %v649 = vadd.f32 %v641, 1e-05
        %v650 = vadd.f32 %v642, 1e-05
        %v651 = vadd.f32 %v643, 1e-05
        %v652 = vrsqrt.pop %v644
        %v653 = vrsqrt.pop %v645
        %v654 = vrsqrt.pop %v646
        %v655 = vrsqrt.pop %v647
        %v656 = vrsqrt.pop %v648
        %v657 = vrsqrt.pop %v649
        %v658 = vrsqrt.pop %v650
        %v659 = vrsqrt.pop %v651
        %v660 = vmul.f32 %v596, %v652
        %v661 = vmul.f32 %v597, %v653
        %v662 = vmul.f32 %v598, %v654
        %v663 = vmul.f32 %v599, %v655
        %v664 = vmul.f32 %v600, %v656
        %v665 = vmul.f32 %v601, %v657
        %v666 = vmul.f32 %v602, %v658
        %v667 = vmul.f32 %v603, %v659
        %v668 = vld [vmem:[%s3] sm:$0x1]
        %v670 = vlaneseq
        %v671 = vshrl.u32 %v670, 7
        %v672 = vsub.s32 0, %v671
        %v673 = vrot.slane %v668, %v672
        %v675 = vmul.f32 %v660, %v673
        %v676 = vmul.f32 %v661, %v673
        %v677 = vmul.f32 %v662, %v673
        %v678 = vmul.f32 %v663, %v673
        %v679 = vmul.f32 %v664, %v673
        %v680 = vmul.f32 %v665, %v673
        %v681 = vmul.f32 %v666, %v673
        %v682 = vmul.f32 %v667, %v673
        %v683 = vld [vmem:[%s4] sm:$0x1]
        %v685 = vlaneseq
        %v686 = vshrl.u32 %v685, 7
        %v687 = vsub.s32 0, %v686
        %v688 = vrot.slane %v683, %v687
        %v690 = vadd.f32 %v675, %v688
        %v691 = vadd.f32 %v676, %v688
        %v692 = vadd.f32 %v677, %v688
        %v693 = vadd.f32 %v678, %v688
        %v694 = vadd.f32 %v679, %v688
        %v695 = vadd.f32 %v680, %v688
        %v696 = vadd.f32 %v681, %v688
        %v697 = vadd.f32 %v682, %v688
        %v698 = vld [vmem:[%s5] sm:$0xff]
        %v699 = vld [vmem:[%s5 + $0x8] sm:$0xff]
        %v700 = vld [vmem:[%s5 + $0x10] sm:$0xff]
        %v701 = vld [vmem:[%s5 + $0x18] sm:$0xff]
        %v702 = vld [vmem:[%s5 + $0x20] sm:$0xff]
        %v703 = vld [vmem:[%s5 + $0x28] sm:$0xff]
        %v704 = vld [vmem:[%s5 + $0x30] sm:$0xff]
        %v705 = vld [vmem:[%s5 + $0x38] sm:$0xff]
        %v706 = vld [vmem:[%s6] sm:$0x1]
        %v708 = vlaneseq
        %v709 = vshrl.u32 %v708, 7
        %v710 = vsub.s32 0, %v709
        %v711 = vrot.slane %v706, %v710
        %v714 = vsel %vm562, %v690, 0
        %v717 = vsel %vm562, %v691, 0
        %v720 = vsel %vm562, %v692, 0
        %v723 = vsel %vm562, %v693, 0
        %v726 = vsel %vm562, %v694, 0
        %v729 = vsel %vm562, %v695, 0
        %v732 = vsel %vm562, %v696, 0
        %v735 = vsel %vm562, %v697, 0
        %737 = vmatprep.subr.mxu0 0.0
        %738 = vmatpush1.msra.mxu0 0.0
        %739 = vmatprep.subr.mxu0 0.0
        %740 = vmatpush1.msra.mxu0 0.0
        %741 = vmatprep.subr.mxu0 0.0
        %742 = vmatpush1.msra.mxu0 0.0
        %743 = vmatprep.subr.mxu0 0.0
        %744 = vmatpush1.msra.mxu0 0.0
        %745 = vmatprep.subr.mxu0 0.0
        %746 = vmatpush1.msra.mxu0 0.0
        %747 = vmatprep.subr.mxu0 0.0
        %748 = vmatpush1.msra.mxu0 0.0
        %749 = vmatprep.subr.mxu0 0.0
        %750 = vmatpush1.msra.mxu0 0.0
        %751 = vmatprep.subr.mxu0 0.0
        %752 = vmatpush1.msra.mxu0 0.0
        %753 = vmatprep.subr.mxu0 0.0
        %754 = vmatpush1.msra.mxu0 %v705
        %755 = vmatprep.subr.mxu0 0.0
        %756 = vmatpush1.msra.mxu0 %v704
        %757 = vmatprep.subr.mxu0 0.0
        %758 = vmatpush1.msra.mxu0 %v703
        %759 = vmatprep.subr.mxu0 0.0
        %760 = vmatpush1.msra.mxu0 %v702
        %761 = vmatprep.subr.mxu0 0.0
        %762 = vmatpush1.msra.mxu0 %v701
        %763 = vmatprep.subr.mxu0 0.0
        %764 = vmatpush1.msra.mxu0 %v700
        %765 = vmatprep.subr.mxu0 0.0
        %766 = vmatpush1.msra.mxu0 %v699
        %767 = vmatprep.subr.mxu0 0.0
        %768 = vmatpush1.msra.mxu0 %v698
        %769 = vmatprep.subr.mxu0 0.0
        %770 = vmatpush2.msra.mxu0 0.0
        %771 = vmatprep.subr.mxu0 0.0
        %772 = vmatpush2.msra.mxu0 0.0
        %773 = vmatprep.subr.mxu0 0.0
        %774 = vmatpush2.msra.mxu0 0.0
        %775 = vmatprep.subr.mxu0 0.0
        %776 = vmatpush2.msra.mxu0 0.0
        %777 = vmatprep.subr.mxu0 0.0
        %778 = vmatpush2.msra.mxu0 0.0
        %779 = vmatprep.subr.mxu0 0.0
        %780 = vmatpush2.msra.mxu0 0.0
        %781 = vmatprep.subr.mxu0 0.0
        %782 = vmatpush2.msra.mxu0 0.0
        %783 = vmatprep.subr.mxu0 0.0
        %784 = vmatpush2.msra.mxu0 0.0
        %785 = vmatprep.subr.mxu0 0.0
        %786 = vmatpush2.msra.mxu0 0.0
        %787 = vmatprep.subr.mxu0 0.0
        %788 = vmatpush2.msra.mxu0 0.0
        %789 = vmatprep.subr.mxu0 0.0
        %790 = vmatpush2.msra.mxu0 0.0
        %791 = vmatprep.subr.mxu0 0.0
        %792 = vmatpush2.msra.mxu0 0.0
        %793 = vmatprep.subr.mxu0 0.0
        %794 = vmatpush2.msra.mxu0 0.0
        %795 = vmatprep.subr.mxu0 0.0
        %796 = vmatpush2.msra.mxu0 0.0
        %797 = vmatprep.subr.mxu0 0.0
        %798 = vmatpush2.msra.mxu0 0.0
        %799 = vmatprep.subr.mxu0 0.0
        %800 = vmatpush2.msra.mxu0 0.0
        %801 = vmatprep.mubr.f32.mxu0 0.0
        %802 = vmatmul.mubr.f32.gmra.mxu0 %v714
        %v803 = vpop.f32.mrf.mxu0
        %v804 = vadd.f32 %v711, %v803
        %v805 = vpop.f32.mrf.mxu0
        %806 = vmatprep.mubr.f32.mxu0 0.0
        %807 = vmatmul.mubr.f32.gmra.mxu0 %v717
        %v808 = vpop.f32.mrf.mxu0
        %v809 = vadd.f32 %v711, %v808
        %v810 = vpop.f32.mrf.mxu0
        %811 = vmatprep.mubr.f32.mxu0 0.0
        %812 = vmatmul.mubr.f32.gmra.mxu0 %v720
        %v813 = vpop.f32.mrf.mxu0
        %v814 = vadd.f32 %v711, %v813
        %v815 = vpop.f32.mrf.mxu0
        %816 = vmatprep.mubr.f32.mxu0 0.0
        %817 = vmatmul.mubr.f32.gmra.mxu0 %v723
        %v818 = vpop.f32.mrf.mxu0
        %v819 = vadd.f32 %v711, %v818
        %v820 = vpop.f32.mrf.mxu0
        %821 = vmatprep.mubr.f32.mxu0 0.0
        %822 = vmatmul.mubr.f32.gmra.mxu0 %v726
        %v823 = vpop.f32.mrf.mxu0
        %v824 = vadd.f32 %v711, %v823
        %v825 = vpop.f32.mrf.mxu0
        %826 = vmatprep.mubr.f32.mxu0 0.0
        %827 = vmatmul.mubr.f32.gmra.mxu0 %v729
        %v828 = vpop.f32.mrf.mxu0
        %v829 = vadd.f32 %v711, %v828
        %v830 = vpop.f32.mrf.mxu0
        %831 = vmatprep.mubr.f32.mxu0 0.0
        %832 = vmatmul.mubr.f32.gmra.mxu0 %v732
        %v833 = vpop.f32.mrf.mxu0
        %v834 = vadd.f32 %v711, %v833
        %v835 = vpop.f32.mrf.mxu0
        %836 = vmatprep.mubr.f32.mxu0 0.0
        %837 = vmatmul.mubr.f32.gmra.mxu0 %v735
        %v838 = vpop.f32.mrf.mxu0
        %v839 = vadd.f32 %v711, %v838
        %v840 = vpop.f32.mrf.mxu0
        %841 = vdwg.mxu0
        %842 = vmax.xlane.f32.xlu0 %v804
        %v843 = vpop.xlane.xlu0 %842
        %844 = vmax.xlane.f32.xlu0 %v809
        %v845 = vpop.xlane.xlu0 %844
        %846 = vmax.xlane.f32.xlu0 %v814
        %v847 = vpop.xlane.xlu0 %846
        %848 = vmax.xlane.f32.xlu0 %v819
        %v849 = vpop.xlane.xlu0 %848
        %850 = vmax.xlane.f32.xlu0 %v824
        %v851 = vpop.xlane.xlu0 %850
        %852 = vmax.xlane.f32.xlu0 %v829
        %v853 = vpop.xlane.xlu0 %852
        %854 = vmax.xlane.f32.xlu0 %v834
        %v855 = vpop.xlane.xlu0 %854
        %856 = vmax.xlane.f32.xlu0 %v839
        %v857 = vpop.xlane.xlu0 %856
        %v858 = vsub.f32 %v804, %v843
        %v859 = vsub.f32 %v809, %v845
        %v860 = vsub.f32 %v814, %v847
        %v861 = vsub.f32 %v819, %v849
        %v862 = vsub.f32 %v824, %v851
        %v863 = vsub.f32 %v829, %v853
        %v864 = vsub.f32 %v834, %v855
        %v865 = vsub.f32 %v839, %v857
        %v866 = vmul.f32 %v858, 1.442695
        %v867 = vpow.pop %v866
        %v868 = vmul.f32 %v859, 1.442695
        %v869 = vpow.pop %v868
        %v870 = vmul.f32 %v860, 1.442695
        %v871 = vpow.pop %v870
        %v872 = vmul.f32 %v861, 1.442695
        %v873 = vpow.pop %v872
        %v874 = vmul.f32 %v862, 1.442695
        %v875 = vpow.pop %v874
        %v876 = vmul.f32 %v863, 1.442695
        %v877 = vpow.pop %v876
        %v878 = vmul.f32 %v864, 1.442695
        %v879 = vpow.pop %v878
        %v880 = vmul.f32 %v865, 1.442695
        %v881 = vpow.pop %v880
        %882 = vadd.xlane.f32.xlu0 %v867
        %v883 = vpop.xlane.xlu0 %882
        %884 = vadd.xlane.f32.xlu0 %v869
        %v885 = vpop.xlane.xlu0 %884
        %886 = vadd.xlane.f32.xlu0 %v871
        %v887 = vpop.xlane.xlu0 %886
        %888 = vadd.xlane.f32.xlu0 %v873
        %v889 = vpop.xlane.xlu0 %888
        %890 = vadd.xlane.f32.xlu0 %v875
        %v891 = vpop.xlane.xlu0 %890
        %892 = vadd.xlane.f32.xlu0 %v877
        %v893 = vpop.xlane.xlu0 %892
        %894 = vadd.xlane.f32.xlu0 %v879
        %v895 = vpop.xlane.xlu0 %894
        %896 = vadd.xlane.f32.xlu0 %v881
        %v897 = vpop.xlane.xlu0 %896
        %v898 = vrcp.pop %v883
        %v899 = vmul.f32 %v867, %v898
        %v900 = vrcp.pop %v885
        %v901 = vmul.f32 %v869, %v900
        %v902 = vrcp.pop %v887
        %v903 = vmul.f32 %v871, %v902
        %v904 = vrcp.pop %v889
        %v905 = vmul.f32 %v873, %v904
        %v906 = vrcp.pop %v891
        %v907 = vmul.f32 %v875, %v906
        %v908 = vrcp.pop %v893
        %v909 = vmul.f32 %v877, %v908
        %v910 = vrcp.pop %v895
        %v911 = vmul.f32 %v879, %v910
        %v912 = vrcp.pop %v897
        %v913 = vmul.f32 %v881, %v912
        %v914 = vmul.f32 %v804, %v899
        %v915 = vmul.f32 %v809, %v901
        %v916 = vmul.f32 %v814, %v903
        %v917 = vmul.f32 %v819, %v905
        %v918 = vmul.f32 %v824, %v907
        %v919 = vmul.f32 %v829, %v909
        %v920 = vmul.f32 %v834, %v911
        %v921 = vmul.f32 %v839, %v913
        %v922 = vmul.f32 %v914, %v914
        %v923 = vmul.f32 %v915, %v915
        %v924 = vmul.f32 %v916, %v916
        %v925 = vmul.f32 %v917, %v917
        %v926 = vmul.f32 %v918, %v918
        %v927 = vmul.f32 %v919, %v919
        %v928 = vmul.f32 %v920, %v920
        %v929 = vmul.f32 %v921, %v921
        %930 = vadd.xlane.f32.xlu0 %v922
        %v931 = vpop.xlane.xlu0 %930
        %932 = vadd.xlane.f32.xlu0 %v923
        %v933 = vpop.xlane.xlu0 %932
        %934 = vadd.xlane.f32.xlu0 %v924
        %v935 = vpop.xlane.xlu0 %934
        %936 = vadd.xlane.f32.xlu0 %v925
        %v937 = vpop.xlane.xlu0 %936
        %938 = vadd.xlane.f32.xlu0 %v926
        %v939 = vpop.xlane.xlu0 %938
        %940 = vadd.xlane.f32.xlu0 %v927
        %v941 = vpop.xlane.xlu0 %940
        %942 = vadd.xlane.f32.xlu0 %v928
        %v943 = vpop.xlane.xlu0 %942
        %944 = vadd.xlane.f32.xlu0 %v929
        %v945 = vpop.xlane.xlu0 %944
        %v946 = vrsqrt.pop %v931
        %v947 = vmul.f32 %v931, %v946
        %vm948 = vcmp.eq.f32.partialorder %v931, inf
        %v949 = vsel %vm948, %v931, %v947
        %vm950 = vcmp.eq.f32.partialorder %v931, 0.0
        %v951 = vand.u32 %v931, 2147483648
        %v952 = vsel %vm950, %v951, %v949
        %v953 = vrsqrt.pop %v933
        %v954 = vmul.f32 %v933, %v953
        %vm955 = vcmp.eq.f32.partialorder %v933, inf
        %v956 = vsel %vm955, %v933, %v954
        %vm957 = vcmp.eq.f32.partialorder %v933, 0.0
        %v958 = vand.u32 %v933, 2147483648
        %v959 = vsel %vm957, %v958, %v956
        %v960 = vrsqrt.pop %v935
        %v961 = vmul.f32 %v935, %v960
        %vm962 = vcmp.eq.f32.partialorder %v935, inf
        %v963 = vsel %vm962, %v935, %v961
        %vm964 = vcmp.eq.f32.partialorder %v935, 0.0
        %v965 = vand.u32 %v935, 2147483648
        %v966 = vsel %vm964, %v965, %v963
        %v967 = vrsqrt.pop %v937
        %v968 = vmul.f32 %v937, %v967
        %vm969 = vcmp.eq.f32.partialorder %v937, inf
        %v970 = vsel %vm969, %v937, %v968
        %vm971 = vcmp.eq.f32.partialorder %v937, 0.0
        %v972 = vand.u32 %v937, 2147483648
        %v973 = vsel %vm971, %v972, %v970
        %v974 = vrsqrt.pop %v939
        %v975 = vmul.f32 %v939, %v974
        %vm976 = vcmp.eq.f32.partialorder %v939, inf
        %v977 = vsel %vm976, %v939, %v975
        %vm978 = vcmp.eq.f32.partialorder %v939, 0.0
        %v979 = vand.u32 %v939, 2147483648
        %v980 = vsel %vm978, %v979, %v977
        %v981 = vrsqrt.pop %v941
        %v982 = vmul.f32 %v941, %v981
        %vm983 = vcmp.eq.f32.partialorder %v941, inf
        %v984 = vsel %vm983, %v941, %v982
        %vm985 = vcmp.eq.f32.partialorder %v941, 0.0
        %v986 = vand.u32 %v941, 2147483648
        %v987 = vsel %vm985, %v986, %v984
        %v988 = vrsqrt.pop %v943
        %v989 = vmul.f32 %v943, %v988
        %vm990 = vcmp.eq.f32.partialorder %v943, inf
        %v991 = vsel %vm990, %v943, %v989
        %vm992 = vcmp.eq.f32.partialorder %v943, 0.0
        %v993 = vand.u32 %v943, 2147483648
        %v994 = vsel %vm992, %v993, %v991
        %v995 = vrsqrt.pop %v945
        %v996 = vmul.f32 %v945, %v995
        %vm997 = vcmp.eq.f32.partialorder %v945, inf
        %v998 = vsel %vm997, %v945, %v996
        %vm999 = vcmp.eq.f32.partialorder %v945, 0.0
        %v1000 = vand.u32 %v945, 2147483648
        %v1001 = vsel %vm999, %v1000, %v998
        %v1002 = vmax.f32 %v952, 1e-12
        %v1003 = vmax.f32 %v959, 1e-12
        %v1004 = vmax.f32 %v966, 1e-12
        %v1005 = vmax.f32 %v973, 1e-12
        %v1006 = vmax.f32 %v980, 1e-12
        %v1007 = vmax.f32 %v987, 1e-12
        %v1008 = vmax.f32 %v994, 1e-12
        %v1009 = vmax.f32 %v1001, 1e-12
        %v1010 = vrcp.pop %v1002
        %v1011 = vmul.f32 %v914, %v1010
        %v1012 = vrcp.pop %v1003
        %v1013 = vmul.f32 %v915, %v1012
        %v1014 = vrcp.pop %v1004
        %v1015 = vmul.f32 %v916, %v1014
        %v1016 = vrcp.pop %v1005
        %v1017 = vmul.f32 %v917, %v1016
        %v1018 = vrcp.pop %v1006
        %v1019 = vmul.f32 %v918, %v1018
        %v1020 = vrcp.pop %v1007
        %v1021 = vmul.f32 %v919, %v1020
        %v1022 = vrcp.pop %v1008
        %v1023 = vmul.f32 %v920, %v1022
        %v1024 = vrcp.pop %v1009
        %v1025 = vmul.f32 %v921, %v1024
        %v1026 = vld [vmem:[%s7] sm:$0x1]
        %v1028 = vlaneseq
        %v1029 = vshrl.u32 %v1028, 7
        %v1030 = vsub.s32 0, %v1029
        %v1031 = vrot.slane %v1026, %v1030
        %v1033 = vmul.f32 %v1011, %v1031
        %v1034 = vmul.f32 %v1013, %v1031
        %v1035 = vmul.f32 %v1015, %v1031
        %v1036 = vmul.f32 %v1017, %v1031
        %v1037 = vmul.f32 %v1019, %v1031
        %v1038 = vmul.f32 %v1021, %v1031
        %v1039 = vmul.f32 %v1023, %v1031
        %v1040 = vmul.f32 %v1025, %v1031
        %1041 = vadd.xlane.f32.xlu0 %v1033
        %v1042 = vpop.xlane.xlu0 %1041
        %1043 = vadd.xlane.f32.xlu0 %v1034
        %v1044 = vpop.xlane.xlu0 %1043
        %1045 = vadd.xlane.f32.xlu0 %v1035
        %v1046 = vpop.xlane.xlu0 %1045
        %1047 = vadd.xlane.f32.xlu0 %v1036
        %v1048 = vpop.xlane.xlu0 %1047
        %1049 = vadd.xlane.f32.xlu0 %v1037
        %v1050 = vpop.xlane.xlu0 %1049
        %1051 = vadd.xlane.f32.xlu0 %v1038
        %v1052 = vpop.xlane.xlu0 %1051
        %1053 = vadd.xlane.f32.xlu0 %v1039
        %v1054 = vpop.xlane.xlu0 %1053
        %1055 = vadd.xlane.f32.xlu0 %v1040
        %v1056 = vpop.xlane.xlu0 %1055
        %v1057 = vmax.f32 %v1042, 0.0
        %v1058 = vmax.f32 %v1044, 0.0
        %v1059 = vmax.f32 %v1046, 0.0
        %v1060 = vmax.f32 %v1048, 0.0
        %v1061 = vmax.f32 %v1050, 0.0
        %v1062 = vmax.f32 %v1052, 0.0
        %v1063 = vmax.f32 %v1054, 0.0
        %v1064 = vmax.f32 %v1056, 0.0
        %v1065 = vmin.f32 %v1057, 1.0
        %v1066 = vmin.f32 %v1058, 1.0
        %v1067 = vmin.f32 %v1059, 1.0
        %v1068 = vmin.f32 %v1060, 1.0
        %v1069 = vmin.f32 %v1061, 1.0
        %v1070 = vmin.f32 %v1062, 1.0
        %v1071 = vmin.f32 %v1063, 1.0
        %v1072 = vmin.f32 %v1064, 1.0
        %v1073 = vmul.f32 %v914, %v1065
        %v1074 = vmul.f32 %v915, %v1066
        %v1075 = vmul.f32 %v916, %v1067
        %v1076 = vmul.f32 %v917, %v1068
        %v1077 = vmul.f32 %v918, %v1069
        %v1078 = vmul.f32 %v919, %v1070
        %v1079 = vmul.f32 %v920, %v1071
        %v1080 = vmul.f32 %v921, %v1072
        %v1081 = vld [vmem:[%s8] sm:$0xff]
        %v1082 = vld [vmem:[%s8 + $0x8] sm:$0xff]
        %v1083 = vld [vmem:[%s8 + $0x10] sm:$0xff]
        %v1084 = vld [vmem:[%s8 + $0x18] sm:$0xff]
        %v1085 = vld [vmem:[%s8 + $0x20] sm:$0xff]
        %v1086 = vld [vmem:[%s8 + $0x28] sm:$0xff]
        %v1087 = vld [vmem:[%s8 + $0x30] sm:$0xff]
        %v1088 = vld [vmem:[%s8 + $0x38] sm:$0xff]
        %v1089 = vld [vmem:[%s8 + $0x40] sm:$0xff]
        %v1090 = vld [vmem:[%s8 + $0x48] sm:$0xff]
        %v1091 = vld [vmem:[%s8 + $0x50] sm:$0xff]
        %v1092 = vld [vmem:[%s8 + $0x58] sm:$0xff]
        %v1093 = vld [vmem:[%s8 + $0x60] sm:$0xff]
        %v1094 = vld [vmem:[%s8 + $0x68] sm:$0xff]
        %v1095 = vld [vmem:[%s8 + $0x70] sm:$0xff]
        %v1096 = vld [vmem:[%s8 + $0x78] sm:$0xff]
        %1097 = vmatprep.subr.mxu0 0.0
        %1098 = vmatpush1.msra.mxu0 %v1096
        %1099 = vmatprep.subr.mxu0 0.0
        %1100 = vmatpush1.msra.mxu0 %v1095
        %1101 = vmatprep.subr.mxu0 0.0
        %1102 = vmatpush1.msra.mxu0 %v1094
        %1103 = vmatprep.subr.mxu0 0.0
        %1104 = vmatpush1.msra.mxu0 %v1093
        %1105 = vmatprep.subr.mxu0 0.0
        %1106 = vmatpush1.msra.mxu0 %v1092
        %1107 = vmatprep.subr.mxu0 0.0
        %1108 = vmatpush1.msra.mxu0 %v1091
        %1109 = vmatprep.subr.mxu0 0.0
        %1110 = vmatpush1.msra.mxu0 %v1090
        %1111 = vmatprep.subr.mxu0 0.0
        %1112 = vmatpush1.msra.mxu0 %v1089
        %1113 = vmatprep.subr.mxu0 0.0
        %1114 = vmatpush1.msra.mxu0 %v1088
        %1115 = vmatprep.subr.mxu0 0.0
        %1116 = vmatpush1.msra.mxu0 %v1087
        %1117 = vmatprep.subr.mxu0 0.0
        %1118 = vmatpush1.msra.mxu0 %v1086
        %1119 = vmatprep.subr.mxu0 0.0
        %1120 = vmatpush1.msra.mxu0 %v1085
        %1121 = vmatprep.subr.mxu0 0.0
        %1122 = vmatpush1.msra.mxu0 %v1084
        %1123 = vmatprep.subr.mxu0 0.0
        %1124 = vmatpush1.msra.mxu0 %v1083
        %1125 = vmatprep.subr.mxu0 0.0
        %1126 = vmatpush1.msra.mxu0 %v1082
        %1127 = vmatprep.subr.mxu0 0.0
        %1128 = vmatpush1.msra.mxu0 %v1081
        %1129 = vmatprep.subr.mxu0 0.0
        %1130 = vmatpush2.msra.mxu0 0.0
        %1131 = vmatprep.subr.mxu0 0.0
        %1132 = vmatpush2.msra.mxu0 0.0
        %1133 = vmatprep.subr.mxu0 0.0
        %1134 = vmatpush2.msra.mxu0 0.0
        %1135 = vmatprep.subr.mxu0 0.0
        %1136 = vmatpush2.msra.mxu0 0.0
        %1137 = vmatprep.subr.mxu0 0.0
        %1138 = vmatpush2.msra.mxu0 0.0
        %1139 = vmatprep.subr.mxu0 0.0
        %1140 = vmatpush2.msra.mxu0 0.0
        %1141 = vmatprep.subr.mxu0 0.0
        %1142 = vmatpush2.msra.mxu0 0.0
        %1143 = vmatprep.subr.mxu0 0.0
        %1144 = vmatpush2.msra.mxu0 0.0
        %1145 = vmatprep.subr.mxu0 0.0
        %1146 = vmatpush2.msra.mxu0 0.0
        %1147 = vmatprep.subr.mxu0 0.0
        %1148 = vmatpush2.msra.mxu0 0.0
        %1149 = vmatprep.subr.mxu0 0.0
        %1150 = vmatpush2.msra.mxu0 0.0
        %1151 = vmatprep.subr.mxu0 0.0
        %1152 = vmatpush2.msra.mxu0 0.0
        %1153 = vmatprep.subr.mxu0 0.0
        %1154 = vmatpush2.msra.mxu0 0.0
        %1155 = vmatprep.subr.mxu0 0.0
        %1156 = vmatpush2.msra.mxu0 0.0
        %1157 = vmatprep.subr.mxu0 0.0
        %1158 = vmatpush2.msra.mxu0 0.0
        %1159 = vmatprep.subr.mxu0 0.0
        %1160 = vmatpush2.msra.mxu0 0.0
        %1161 = vmatprep.mubr.f32.mxu0 0.0
        %1162 = vmatmul.mubr.f32.gmra.mxu0 %v1073
        %v1163 = vpop.f32.mrf.mxu0
        %v1164 = vadd.f32 0.0, %v1163
        %v1165 = vpop.f32.mrf.mxu0
        %1166 = vmatprep.mubr.f32.mxu0 0.0
        %1167 = vmatmul.mubr.f32.gmra.mxu0 %v1074
        %v1168 = vpop.f32.mrf.mxu0
        %v1169 = vadd.f32 0.0, %v1168
        %v1170 = vpop.f32.mrf.mxu0
        %1171 = vmatprep.mubr.f32.mxu0 0.0
        %1172 = vmatmul.mubr.f32.gmra.mxu0 %v1075
        %v1173 = vpop.f32.mrf.mxu0
        %v1174 = vadd.f32 0.0, %v1173
        %v1175 = vpop.f32.mrf.mxu0
        %1176 = vmatprep.mubr.f32.mxu0 0.0
        %1177 = vmatmul.mubr.f32.gmra.mxu0 %v1076
        %v1178 = vpop.f32.mrf.mxu0
        %v1179 = vadd.f32 0.0, %v1178
        %v1180 = vpop.f32.mrf.mxu0
        %1181 = vmatprep.mubr.f32.mxu0 0.0
        %1182 = vmatmul.mubr.f32.gmra.mxu0 %v1077
        %v1183 = vpop.f32.mrf.mxu0
        %v1184 = vadd.f32 0.0, %v1183
        %v1185 = vpop.f32.mrf.mxu0
        %1186 = vmatprep.mubr.f32.mxu0 0.0
        %1187 = vmatmul.mubr.f32.gmra.mxu0 %v1078
        %v1188 = vpop.f32.mrf.mxu0
        %v1189 = vadd.f32 0.0, %v1188
        %v1190 = vpop.f32.mrf.mxu0
        %1191 = vmatprep.mubr.f32.mxu0 0.0
        %1192 = vmatmul.mubr.f32.gmra.mxu0 %v1079
        %v1193 = vpop.f32.mrf.mxu0
        %v1194 = vadd.f32 0.0, %v1193
        %v1195 = vpop.f32.mrf.mxu0
        %1196 = vmatprep.mubr.f32.mxu0 0.0
        %1197 = vmatmul.mubr.f32.gmra.mxu0 %v1080
        %v1198 = vpop.f32.mrf.mxu0
        %v1199 = vadd.f32 0.0, %v1198
        %v1200 = vpop.f32.mrf.mxu0
        %1201 = vdwg.mxu0
        %v1202 = vld [vmem:[%s9] sm:$0xff]
        %v1203 = vld [vmem:[%s9 + $0x8] sm:$0xff]
        %v1204 = vld [vmem:[%s9 + $0x10] sm:$0xff]
        %v1205 = vld [vmem:[%s9 + $0x18] sm:$0xff]
        %v1206 = vld [vmem:[%s9 + $0x20] sm:$0xff]
        %v1207 = vld [vmem:[%s9 + $0x28] sm:$0xff]
        %v1208 = vld [vmem:[%s9 + $0x30] sm:$0xff]
        %v1209 = vld [vmem:[%s9 + $0x38] sm:$0xff]
        %v1210 = vld [vmem:[%s9 + $0x40] sm:$0xff]
        %v1211 = vld [vmem:[%s9 + $0x48] sm:$0xff]
        %v1212 = vld [vmem:[%s9 + $0x50] sm:$0xff]
        %v1213 = vld [vmem:[%s9 + $0x58] sm:$0xff]
        %v1214 = vld [vmem:[%s9 + $0x60] sm:$0xff]
        %v1215 = vld [vmem:[%s9 + $0x68] sm:$0xff]
        %v1216 = vld [vmem:[%s9 + $0x70] sm:$0xff]
        %v1217 = vld [vmem:[%s9 + $0x78] sm:$0xff]
        %v1218 = vld [vmem:[%s9 + $0x80] sm:$0xff]
        %v1219 = vld [vmem:[%s9 + $0x88] sm:$0xff]
        %v1220 = vld [vmem:[%s9 + $0x90] sm:$0xff]
        %v1221 = vld [vmem:[%s9 + $0x98] sm:$0xff]
        %v1222 = vld [vmem:[%s9 + $0xa0] sm:$0xff]
        %v1223 = vld [vmem:[%s9 + $0xa8] sm:$0xff]
        %v1224 = vld [vmem:[%s9 + $0xb0] sm:$0xff]
        %v1225 = vld [vmem:[%s9 + $0xb8] sm:$0xff]
        %v1226 = vld [vmem:[%s9 + $0xc0] sm:$0xff]
        %v1227 = vld [vmem:[%s9 + $0xc8] sm:$0xff]
        %v1228 = vld [vmem:[%s9 + $0xd0] sm:$0xff]
        %v1229 = vld [vmem:[%s9 + $0xd8] sm:$0xff]
        %v1230 = vld [vmem:[%s9 + $0xe0] sm:$0xff]
        %v1231 = vld [vmem:[%s9 + $0xe8] sm:$0xff]
        %v1232 = vld [vmem:[%s9 + $0xf0] sm:$0xff]
        %v1233 = vld [vmem:[%s9 + $0xf8] sm:$0xff]
        %v1235 = vsel %vm562, %v1202, 0
        %v1238 = vsel %vm562, %v1203, 0
        %v1241 = vsel %vm562, %v1204, 0
        %v1244 = vsel %vm562, %v1205, 0
        %v1247 = vsel %vm562, %v1206, 0
        %v1250 = vsel %vm562, %v1207, 0
        %v1253 = vsel %vm562, %v1208, 0
        %v1256 = vsel %vm562, %v1209, 0
        %v1259 = vsel %vm562, %v1210, 0
        %v1262 = vsel %vm562, %v1211, 0
        %v1265 = vsel %vm562, %v1212, 0
        %v1268 = vsel %vm562, %v1213, 0
        %v1271 = vsel %vm562, %v1214, 0
        %v1274 = vsel %vm562, %v1215, 0
        %v1277 = vsel %vm562, %v1216, 0
        %v1280 = vsel %vm562, %v1217, 0
        %v1283 = vsel %vm562, %v1218, 0
        %v1286 = vsel %vm562, %v1219, 0
        %v1289 = vsel %vm562, %v1220, 0
        %v1292 = vsel %vm562, %v1221, 0
        %v1295 = vsel %vm562, %v1222, 0
        %v1298 = vsel %vm562, %v1223, 0
        %v1301 = vsel %vm562, %v1224, 0
        %v1304 = vsel %vm562, %v1225, 0
        %v1307 = vsel %vm562, %v1226, 0
        %v1310 = vsel %vm562, %v1227, 0
        %v1313 = vsel %vm562, %v1228, 0
        %v1316 = vsel %vm562, %v1229, 0
        %v1319 = vsel %vm562, %v1230, 0
        %v1322 = vsel %vm562, %v1231, 0
        %v1325 = vsel %vm562, %v1232, 0
        %v1328 = vsel %vm562, %v1233, 0
        %1330 = vmatprep.subr.mxu0 0.0
        %1331 = vmatpush1.msra.mxu0 0.0
        %1332 = vmatprep.subr.mxu0 0.0
        %1333 = vmatpush1.msra.mxu0 0.0
        %1334 = vmatprep.subr.mxu0 0.0
        %1335 = vmatpush1.msra.mxu0 0.0
        %1336 = vmatprep.subr.mxu0 0.0
        %1337 = vmatpush1.msra.mxu0 0.0
        %1338 = vmatprep.subr.mxu0 0.0
        %1339 = vmatpush1.msra.mxu0 0.0
        %1340 = vmatprep.subr.mxu0 0.0
        %1341 = vmatpush1.msra.mxu0 0.0
        %1342 = vmatprep.subr.mxu0 0.0
        %1343 = vmatpush1.msra.mxu0 0.0
        %1344 = vmatprep.subr.mxu0 0.0
        %1345 = vmatpush1.msra.mxu0 0.0
        %1346 = vmatprep.subr.mxu0 0.0
        %1347 = vmatpush1.msra.mxu0 %v1199
        %1348 = vmatprep.subr.mxu0 0.0
        %1349 = vmatpush1.msra.mxu0 %v1194
        %1350 = vmatprep.subr.mxu0 0.0
        %1351 = vmatpush1.msra.mxu0 %v1189
        %1352 = vmatprep.subr.mxu0 0.0
        %1353 = vmatpush1.msra.mxu0 %v1184
        %1354 = vmatprep.subr.mxu0 0.0
        %1355 = vmatpush1.msra.mxu0 %v1179
        %1356 = vmatprep.subr.mxu0 0.0
        %1357 = vmatpush1.msra.mxu0 %v1174
        %1358 = vmatprep.subr.mxu0 0.0
        %1359 = vmatpush1.msra.mxu0 %v1169
        %1360 = vmatprep.subr.mxu0 0.0
        %1361 = vmatpush1.msra.mxu0 %v1164
        %1362 = vmatprep.subr.mxu0 0.0
        %1363 = vmatpush2.msra.mxu0 0.0
        %1364 = vmatprep.subr.mxu0 0.0
        %1365 = vmatpush2.msra.mxu0 0.0
        %1366 = vmatprep.subr.mxu0 0.0
        %1367 = vmatpush2.msra.mxu0 0.0
        %1368 = vmatprep.subr.mxu0 0.0
        %1369 = vmatpush2.msra.mxu0 0.0
        %1370 = vmatprep.subr.mxu0 0.0
        %1371 = vmatpush2.msra.mxu0 0.0
        %1372 = vmatprep.subr.mxu0 0.0
        %1373 = vmatpush2.msra.mxu0 0.0
        %1374 = vmatprep.subr.mxu0 0.0
        %1375 = vmatpush2.msra.mxu0 0.0
        %1376 = vmatprep.subr.mxu0 0.0
        %1377 = vmatpush2.msra.mxu0 0.0
        %1378 = vmatprep.subr.mxu0 0.0
        %1379 = vmatpush2.msra.mxu0 0.0
        %1380 = vmatprep.subr.mxu0 0.0
        %1381 = vmatpush2.msra.mxu0 0.0
        %1382 = vmatprep.subr.mxu0 0.0
        %1383 = vmatpush2.msra.mxu0 0.0
        %1384 = vmatprep.subr.mxu0 0.0
        %1385 = vmatpush2.msra.mxu0 0.0
        %1386 = vmatprep.subr.mxu0 0.0
        %1387 = vmatpush2.msra.mxu0 0.0
        %1388 = vmatprep.subr.mxu0 0.0
        %1389 = vmatpush2.msra.mxu0 0.0
        %1390 = vmatprep.subr.mxu0 0.0
        %1391 = vmatpush2.msra.mxu0 0.0
        %1392 = vmatprep.subr.mxu0 0.0
        %1393 = vmatpush2.msra.mxu0 0.0
        %1394 = vmatprep.mubr.f32.mxu0 0.0
        %1395 = vmatmul.mubr.f32.gmra.mxu0 %v1235
        %v1396 = vpop.f32.mrf.mxu0
        %v1397 = vadd.f32 0.0, %v1396
        %v1398 = vpop.f32.mrf.mxu0
        %1399 = vmatprep.mubr.f32.mxu0 0.0
        %1400 = vmatmul.mubr.f32.gmra.mxu0 %v1238
        %v1401 = vpop.f32.mrf.mxu0
        %v1402 = vadd.f32 0.0, %v1401
        %v1403 = vpop.f32.mrf.mxu0
        %1404 = vmatprep.mubr.f32.mxu0 0.0
        %1405 = vmatmul.mubr.f32.gmra.mxu0 %v1241
        %v1406 = vpop.f32.mrf.mxu0
        %v1407 = vadd.f32 0.0, %v1406
        %v1408 = vpop.f32.mrf.mxu0
        %1409 = vmatprep.mubr.f32.mxu0 0.0
        %1410 = vmatmul.mubr.f32.gmra.mxu0 %v1244
        %v1411 = vpop.f32.mrf.mxu0
        %v1412 = vadd.f32 0.0, %v1411
        %v1413 = vpop.f32.mrf.mxu0
        %1414 = vmatprep.mubr.f32.mxu0 0.0
        %1415 = vmatmul.mubr.f32.gmra.mxu0 %v1247
        %v1416 = vpop.f32.mrf.mxu0
        %v1417 = vadd.f32 0.0, %v1416
        %v1418 = vpop.f32.mrf.mxu0
        %1419 = vmatprep.mubr.f32.mxu0 0.0
        %1420 = vmatmul.mubr.f32.gmra.mxu0 %v1250
        %v1421 = vpop.f32.mrf.mxu0
        %v1422 = vadd.f32 0.0, %v1421
        %v1423 = vpop.f32.mrf.mxu0
        %1424 = vmatprep.mubr.f32.mxu0 0.0
        %1425 = vmatmul.mubr.f32.gmra.mxu0 %v1253
        %v1426 = vpop.f32.mrf.mxu0
        %v1427 = vadd.f32 0.0, %v1426
        %v1428 = vpop.f32.mrf.mxu0
        %1429 = vmatprep.mubr.f32.mxu0 0.0
        %1430 = vmatmul.mubr.f32.gmra.mxu0 %v1256
        %v1431 = vpop.f32.mrf.mxu0
        %v1432 = vadd.f32 0.0, %v1431
        %v1433 = vpop.f32.mrf.mxu0
        %1434 = vmatprep.mubr.f32.mxu0 0.0
        %1435 = vmatmul.mubr.f32.gmra.mxu0 %v1259
        %v1436 = vpop.f32.mrf.mxu0
        %v1437 = vadd.f32 0.0, %v1436
        %v1438 = vpop.f32.mrf.mxu0
        %1439 = vmatprep.mubr.f32.mxu0 0.0
        %1440 = vmatmul.mubr.f32.gmra.mxu0 %v1262
        %v1441 = vpop.f32.mrf.mxu0
        %v1442 = vadd.f32 0.0, %v1441
        %v1443 = vpop.f32.mrf.mxu0
        %1444 = vmatprep.mubr.f32.mxu0 0.0
        %1445 = vmatmul.mubr.f32.gmra.mxu0 %v1265
        %v1446 = vpop.f32.mrf.mxu0
        %v1447 = vadd.f32 0.0, %v1446
        %v1448 = vpop.f32.mrf.mxu0
        %1449 = vmatprep.mubr.f32.mxu0 0.0
        %1450 = vmatmul.mubr.f32.gmra.mxu0 %v1268
        %v1451 = vpop.f32.mrf.mxu0
        %v1452 = vadd.f32 0.0, %v1451
        %v1453 = vpop.f32.mrf.mxu0
        %1454 = vmatprep.mubr.f32.mxu0 0.0
        %1455 = vmatmul.mubr.f32.gmra.mxu0 %v1271
        %v1456 = vpop.f32.mrf.mxu0
        %v1457 = vadd.f32 0.0, %v1456
        %v1458 = vpop.f32.mrf.mxu0
        %1459 = vmatprep.mubr.f32.mxu0 0.0
        %1460 = vmatmul.mubr.f32.gmra.mxu0 %v1274
        %v1461 = vpop.f32.mrf.mxu0
        %v1462 = vadd.f32 0.0, %v1461
        %v1463 = vpop.f32.mrf.mxu0
        %1464 = vmatprep.mubr.f32.mxu0 0.0
        %1465 = vmatmul.mubr.f32.gmra.mxu0 %v1277
        %v1466 = vpop.f32.mrf.mxu0
        %v1467 = vadd.f32 0.0, %v1466
        %v1468 = vpop.f32.mrf.mxu0
        %1469 = vmatprep.mubr.f32.mxu0 0.0
        %1470 = vmatmul.mubr.f32.gmra.mxu0 %v1280
        %v1471 = vpop.f32.mrf.mxu0
        %v1472 = vadd.f32 0.0, %v1471
        %v1473 = vpop.f32.mrf.mxu0
        %1474 = vmatprep.mubr.f32.mxu0 0.0
        %1475 = vmatmul.mubr.f32.gmra.mxu0 %v1283
        %v1476 = vpop.f32.mrf.mxu0
        %v1477 = vadd.f32 0.0, %v1476
        %v1478 = vpop.f32.mrf.mxu0
        %1479 = vmatprep.mubr.f32.mxu0 0.0
        %1480 = vmatmul.mubr.f32.gmra.mxu0 %v1286
        %v1481 = vpop.f32.mrf.mxu0
        %v1482 = vadd.f32 0.0, %v1481
        %v1483 = vpop.f32.mrf.mxu0
        %1484 = vmatprep.mubr.f32.mxu0 0.0
        %1485 = vmatmul.mubr.f32.gmra.mxu0 %v1289
        %v1486 = vpop.f32.mrf.mxu0
        %v1487 = vadd.f32 0.0, %v1486
        %v1488 = vpop.f32.mrf.mxu0
        %1489 = vmatprep.mubr.f32.mxu0 0.0
        %1490 = vmatmul.mubr.f32.gmra.mxu0 %v1292
        %v1491 = vpop.f32.mrf.mxu0
        %v1492 = vadd.f32 0.0, %v1491
        %v1493 = vpop.f32.mrf.mxu0
        %1494 = vmatprep.mubr.f32.mxu0 0.0
        %1495 = vmatmul.mubr.f32.gmra.mxu0 %v1295
        %v1496 = vpop.f32.mrf.mxu0
        %v1497 = vadd.f32 0.0, %v1496
        %v1498 = vpop.f32.mrf.mxu0
        %1499 = vmatprep.mubr.f32.mxu0 0.0
        %1500 = vmatmul.mubr.f32.gmra.mxu0 %v1298
        %v1501 = vpop.f32.mrf.mxu0
        %v1502 = vadd.f32 0.0, %v1501
        %v1503 = vpop.f32.mrf.mxu0
        %1504 = vmatprep.mubr.f32.mxu0 0.0
        %1505 = vmatmul.mubr.f32.gmra.mxu0 %v1301
        %v1506 = vpop.f32.mrf.mxu0
        %v1507 = vadd.f32 0.0, %v1506
        %v1508 = vpop.f32.mrf.mxu0
        %1509 = vmatprep.mubr.f32.mxu0 0.0
        %1510 = vmatmul.mubr.f32.gmra.mxu0 %v1304
        %v1511 = vpop.f32.mrf.mxu0
        %v1512 = vadd.f32 0.0, %v1511
        %v1513 = vpop.f32.mrf.mxu0
        %1514 = vmatprep.mubr.f32.mxu0 0.0
        %1515 = vmatmul.mubr.f32.gmra.mxu0 %v1307
        %v1516 = vpop.f32.mrf.mxu0
        %v1517 = vadd.f32 0.0, %v1516
        %v1518 = vpop.f32.mrf.mxu0
        %1519 = vmatprep.mubr.f32.mxu0 0.0
        %1520 = vmatmul.mubr.f32.gmra.mxu0 %v1310
        %v1521 = vpop.f32.mrf.mxu0
        %v1522 = vadd.f32 0.0, %v1521
        %v1523 = vpop.f32.mrf.mxu0
        %1524 = vmatprep.mubr.f32.mxu0 0.0
        %1525 = vmatmul.mubr.f32.gmra.mxu0 %v1313
        %v1526 = vpop.f32.mrf.mxu0
        %v1527 = vadd.f32 0.0, %v1526
        %v1528 = vpop.f32.mrf.mxu0
        %1529 = vmatprep.mubr.f32.mxu0 0.0
        %1530 = vmatmul.mubr.f32.gmra.mxu0 %v1316
        %v1531 = vpop.f32.mrf.mxu0
        %v1532 = vadd.f32 0.0, %v1531
        %v1533 = vpop.f32.mrf.mxu0
        %1534 = vmatprep.mubr.f32.mxu0 0.0
        %1535 = vmatmul.mubr.f32.gmra.mxu0 %v1319
        %v1536 = vpop.f32.mrf.mxu0
        %v1537 = vadd.f32 0.0, %v1536
        %v1538 = vpop.f32.mrf.mxu0
        %1539 = vmatprep.mubr.f32.mxu0 0.0
        %1540 = vmatmul.mubr.f32.gmra.mxu0 %v1322
        %v1541 = vpop.f32.mrf.mxu0
        %v1542 = vadd.f32 0.0, %v1541
        %v1543 = vpop.f32.mrf.mxu0
        %1544 = vmatprep.mubr.f32.mxu0 0.0
        %1545 = vmatmul.mubr.f32.gmra.mxu0 %v1325
        %v1546 = vpop.f32.mrf.mxu0
        %v1547 = vadd.f32 0.0, %v1546
        %v1548 = vpop.f32.mrf.mxu0
        %1549 = vmatprep.mubr.f32.mxu0 0.0
        %1550 = vmatmul.mubr.f32.gmra.mxu0 %v1328
        %v1551 = vpop.f32.mrf.mxu0
        %v1552 = vadd.f32 0.0, %v1551
        %v1553 = vpop.f32.mrf.mxu0
        %1554 = vdwg.mxu0
        %v1555 = vld [vmem:[%s10] sm:$0xff]
        %v1556 = vld [vmem:[%s10 + $0x8] sm:$0xff]
        %v1557 = vld [vmem:[%s10 + $0x10] sm:$0xff]
        %v1558 = vld [vmem:[%s10 + $0x18] sm:$0xff]
        %v1559 = vld [vmem:[%s10 + $0x20] sm:$0xff]
        %v1560 = vld [vmem:[%s10 + $0x28] sm:$0xff]
        %v1561 = vld [vmem:[%s10 + $0x30] sm:$0xff]
        %v1562 = vld [vmem:[%s10 + $0x38] sm:$0xff]
        %v1563 = vld [vmem:[%s10 + $0x40] sm:$0xff]
        %v1564 = vld [vmem:[%s10 + $0x48] sm:$0xff]
        %v1565 = vld [vmem:[%s10 + $0x50] sm:$0xff]
        %v1566 = vld [vmem:[%s10 + $0x58] sm:$0xff]
        %v1567 = vld [vmem:[%s10 + $0x60] sm:$0xff]
        %v1568 = vld [vmem:[%s10 + $0x68] sm:$0xff]
        %v1569 = vld [vmem:[%s10 + $0x70] sm:$0xff]
        %v1570 = vld [vmem:[%s10 + $0x78] sm:$0xff]
        %v1571 = vld [vmem:[%s11] sm:$0x1]
        %v1573 = vlaneseq
        %v1574 = vshrl.u32 %v1573, 7
        %v1575 = vsub.s32 0, %v1574
        %v1576 = vrot.slane %v1571, %v1575
        %1578 = vmatprep.subr.mxu0 0.0
        %1579 = vmatpush1.msra.mxu0 %v1570
        %1580 = vmatprep.subr.mxu0 0.0
        %1581 = vmatpush1.msra.mxu0 %v1569
        %1582 = vmatprep.subr.mxu0 0.0
        %1583 = vmatpush1.msra.mxu0 %v1568
        %1584 = vmatprep.subr.mxu0 0.0
        %1585 = vmatpush1.msra.mxu0 %v1567
        %1586 = vmatprep.subr.mxu0 0.0
        %1587 = vmatpush1.msra.mxu0 %v1566
        %1588 = vmatprep.subr.mxu0 0.0
        %1589 = vmatpush1.msra.mxu0 %v1565
        %1590 = vmatprep.subr.mxu0 0.0
        %1591 = vmatpush1.msra.mxu0 %v1564
        %1592 = vmatprep.subr.mxu0 0.0
        %1593 = vmatpush1.msra.mxu0 %v1563
        %1594 = vmatprep.subr.mxu0 0.0
        %1595 = vmatpush1.msra.mxu0 %v1562
        %1596 = vmatprep.subr.mxu0 0.0
        %1597 = vmatpush1.msra.mxu0 %v1561
        %1598 = vmatprep.subr.mxu0 0.0
        %1599 = vmatpush1.msra.mxu0 %v1560
        %1600 = vmatprep.subr.mxu0 0.0
        %1601 = vmatpush1.msra.mxu0 %v1559
        %1602 = vmatprep.subr.mxu0 0.0
        %1603 = vmatpush1.msra.mxu0 %v1558
        %1604 = vmatprep.subr.mxu0 0.0
        %1605 = vmatpush1.msra.mxu0 %v1557
        %1606 = vmatprep.subr.mxu0 0.0
        %1607 = vmatpush1.msra.mxu0 %v1556
        %1608 = vmatprep.subr.mxu0 0.0
        %1609 = vmatpush1.msra.mxu0 %v1555
        %1610 = vmatprep.subr.mxu0 0.0
        %1611 = vmatpush2.msra.mxu0 0.0
        %1612 = vmatprep.subr.mxu0 0.0
        %1613 = vmatpush2.msra.mxu0 0.0
        %1614 = vmatprep.subr.mxu0 0.0
        %1615 = vmatpush2.msra.mxu0 0.0
        %1616 = vmatprep.subr.mxu0 0.0
        %1617 = vmatpush2.msra.mxu0 0.0
        %1618 = vmatprep.subr.mxu0 0.0
        %1619 = vmatpush2.msra.mxu0 0.0
        %1620 = vmatprep.subr.mxu0 0.0
        %1621 = vmatpush2.msra.mxu0 0.0
        %1622 = vmatprep.subr.mxu0 0.0
        %1623 = vmatpush2.msra.mxu0 0.0
        %1624 = vmatprep.subr.mxu0 0.0
        %1625 = vmatpush2.msra.mxu0 0.0
        %1626 = vmatprep.subr.mxu0 0.0
        %1627 = vmatpush2.msra.mxu0 0.0
        %1628 = vmatprep.subr.mxu0 0.0
        %1629 = vmatpush2.msra.mxu0 0.0
        %1630 = vmatprep.subr.mxu0 0.0
        %1631 = vmatpush2.msra.mxu0 0.0
        %1632 = vmatprep.subr.mxu0 0.0
        %1633 = vmatpush2.msra.mxu0 0.0
        %1634 = vmatprep.subr.mxu0 0.0
        %1635 = vmatpush2.msra.mxu0 0.0
        %1636 = vmatprep.subr.mxu0 0.0
        %1637 = vmatpush2.msra.mxu0 0.0
        %1638 = vmatprep.subr.mxu0 0.0
        %1639 = vmatpush2.msra.mxu0 0.0
        %1640 = vmatprep.subr.mxu0 0.0
        %1641 = vmatpush2.msra.mxu0 0.0
        %1642 = vmatprep.mubr.f32.mxu0 0.0
        %1643 = vmatmul.mubr.f32.gmra.mxu0 %v1397
        %v1644 = vpop.f32.mrf.mxu0
        %v1645 = vadd.f32 %v1576, %v1644
        %v1646 = vpop.f32.mrf.mxu0
        %1647 = vmatprep.mubr.f32.mxu0 0.0
        %1648 = vmatmul.mubr.f32.gmra.mxu0 %v1402
        %v1649 = vpop.f32.mrf.mxu0
        %v1650 = vadd.f32 %v1576, %v1649
        %v1651 = vpop.f32.mrf.mxu0
        %1652 = vmatprep.mubr.f32.mxu0 0.0
        %1653 = vmatmul.mubr.f32.gmra.mxu0 %v1407
        %v1654 = vpop.f32.mrf.mxu0
        %v1655 = vadd.f32 %v1576, %v1654
        %v1656 = vpop.f32.mrf.mxu0
        %1657 = vmatprep.mubr.f32.mxu0 0.0
        %1658 = vmatmul.mubr.f32.gmra.mxu0 %v1412
        %v1659 = vpop.f32.mrf.mxu0
        %v1660 = vadd.f32 %v1576, %v1659
        %v1661 = vpop.f32.mrf.mxu0
        %1662 = vmatprep.mubr.f32.mxu0 0.0
        %1663 = vmatmul.mubr.f32.gmra.mxu0 %v1417
        %v1664 = vpop.f32.mrf.mxu0
        %v1665 = vadd.f32 %v1576, %v1664
        %v1666 = vpop.f32.mrf.mxu0
        %1667 = vmatprep.mubr.f32.mxu0 0.0
        %1668 = vmatmul.mubr.f32.gmra.mxu0 %v1422
        %v1669 = vpop.f32.mrf.mxu0
        %v1670 = vadd.f32 %v1576, %v1669
        %v1671 = vpop.f32.mrf.mxu0
        %1672 = vmatprep.mubr.f32.mxu0 0.0
        %1673 = vmatmul.mubr.f32.gmra.mxu0 %v1427
        %v1674 = vpop.f32.mrf.mxu0
        %v1675 = vadd.f32 %v1576, %v1674
        %v1676 = vpop.f32.mrf.mxu0
        %1677 = vmatprep.mubr.f32.mxu0 0.0
        %1678 = vmatmul.mubr.f32.gmra.mxu0 %v1432
        %v1679 = vpop.f32.mrf.mxu0
        %v1680 = vadd.f32 %v1576, %v1679
        %v1681 = vpop.f32.mrf.mxu0
        %1682 = vmatprep.mubr.f32.mxu0 0.0
        %1683 = vmatmul.mubr.f32.gmra.mxu0 %v1437
        %v1684 = vpop.f32.mrf.mxu0
        %v1685 = vadd.f32 %v1576, %v1684
        %v1686 = vpop.f32.mrf.mxu0
        %1687 = vmatprep.mubr.f32.mxu0 0.0
        %1688 = vmatmul.mubr.f32.gmra.mxu0 %v1442
        %v1689 = vpop.f32.mrf.mxu0
        %v1690 = vadd.f32 %v1576, %v1689
        %v1691 = vpop.f32.mrf.mxu0
        %1692 = vmatprep.mubr.f32.mxu0 0.0
        %1693 = vmatmul.mubr.f32.gmra.mxu0 %v1447
        %v1694 = vpop.f32.mrf.mxu0
        %v1695 = vadd.f32 %v1576, %v1694
        %v1696 = vpop.f32.mrf.mxu0
        %1697 = vmatprep.mubr.f32.mxu0 0.0
        %1698 = vmatmul.mubr.f32.gmra.mxu0 %v1452
        %v1699 = vpop.f32.mrf.mxu0
        %v1700 = vadd.f32 %v1576, %v1699
        %v1701 = vpop.f32.mrf.mxu0
        %1702 = vmatprep.mubr.f32.mxu0 0.0
        %1703 = vmatmul.mubr.f32.gmra.mxu0 %v1457
        %v1704 = vpop.f32.mrf.mxu0
        %v1705 = vadd.f32 %v1576, %v1704
        %v1706 = vpop.f32.mrf.mxu0
        %1707 = vmatprep.mubr.f32.mxu0 0.0
        %1708 = vmatmul.mubr.f32.gmra.mxu0 %v1462
        %v1709 = vpop.f32.mrf.mxu0
        %v1710 = vadd.f32 %v1576, %v1709
        %v1711 = vpop.f32.mrf.mxu0
        %1712 = vmatprep.mubr.f32.mxu0 0.0
        %1713 = vmatmul.mubr.f32.gmra.mxu0 %v1467
        %v1714 = vpop.f32.mrf.mxu0
        %v1715 = vadd.f32 %v1576, %v1714
        %v1716 = vpop.f32.mrf.mxu0
        %1717 = vmatprep.mubr.f32.mxu0 0.0
        %1718 = vmatmul.mubr.f32.gmra.mxu0 %v1472
        %v1719 = vpop.f32.mrf.mxu0
        %v1720 = vadd.f32 %v1576, %v1719
        %v1721 = vpop.f32.mrf.mxu0
        %1722 = vmatprep.mubr.f32.mxu0 0.0
        %1723 = vmatmul.mubr.f32.gmra.mxu0 %v1477
        %v1724 = vpop.f32.mrf.mxu0
        %v1725 = vadd.f32 %v1576, %v1724
        %v1726 = vpop.f32.mrf.mxu0
        %1727 = vmatprep.mubr.f32.mxu0 0.0
        %1728 = vmatmul.mubr.f32.gmra.mxu0 %v1482
        %v1729 = vpop.f32.mrf.mxu0
        %v1730 = vadd.f32 %v1576, %v1729
        %v1731 = vpop.f32.mrf.mxu0
        %1732 = vmatprep.mubr.f32.mxu0 0.0
        %1733 = vmatmul.mubr.f32.gmra.mxu0 %v1487
        %v1734 = vpop.f32.mrf.mxu0
        %v1735 = vadd.f32 %v1576, %v1734
        %v1736 = vpop.f32.mrf.mxu0
        %1737 = vmatprep.mubr.f32.mxu0 0.0
        %1738 = vmatmul.mubr.f32.gmra.mxu0 %v1492
        %v1739 = vpop.f32.mrf.mxu0
        %v1740 = vadd.f32 %v1576, %v1739
        %v1741 = vpop.f32.mrf.mxu0
        %1742 = vmatprep.mubr.f32.mxu0 0.0
        %1743 = vmatmul.mubr.f32.gmra.mxu0 %v1497
        %v1744 = vpop.f32.mrf.mxu0
        %v1745 = vadd.f32 %v1576, %v1744
        %v1746 = vpop.f32.mrf.mxu0
        %1747 = vmatprep.mubr.f32.mxu0 0.0
        %1748 = vmatmul.mubr.f32.gmra.mxu0 %v1502
        %v1749 = vpop.f32.mrf.mxu0
        %v1750 = vadd.f32 %v1576, %v1749
        %v1751 = vpop.f32.mrf.mxu0
        %1752 = vmatprep.mubr.f32.mxu0 0.0
        %1753 = vmatmul.mubr.f32.gmra.mxu0 %v1507
        %v1754 = vpop.f32.mrf.mxu0
        %v1755 = vadd.f32 %v1576, %v1754
        %v1756 = vpop.f32.mrf.mxu0
        %1757 = vmatprep.mubr.f32.mxu0 0.0
        %1758 = vmatmul.mubr.f32.gmra.mxu0 %v1512
        %v1759 = vpop.f32.mrf.mxu0
        %v1760 = vadd.f32 %v1576, %v1759
        %v1761 = vpop.f32.mrf.mxu0
        %1762 = vmatprep.mubr.f32.mxu0 0.0
        %1763 = vmatmul.mubr.f32.gmra.mxu0 %v1517
        %v1764 = vpop.f32.mrf.mxu0
        %v1765 = vadd.f32 %v1576, %v1764
        %v1766 = vpop.f32.mrf.mxu0
        %1767 = vmatprep.mubr.f32.mxu0 0.0
        %1768 = vmatmul.mubr.f32.gmra.mxu0 %v1522
        %v1769 = vpop.f32.mrf.mxu0
        %v1770 = vadd.f32 %v1576, %v1769
        %v1771 = vpop.f32.mrf.mxu0
        %1772 = vmatprep.mubr.f32.mxu0 0.0
        %1773 = vmatmul.mubr.f32.gmra.mxu0 %v1527
        %v1774 = vpop.f32.mrf.mxu0
        %v1775 = vadd.f32 %v1576, %v1774
        %v1776 = vpop.f32.mrf.mxu0
        %1777 = vmatprep.mubr.f32.mxu0 0.0
        %1778 = vmatmul.mubr.f32.gmra.mxu0 %v1532
        %v1779 = vpop.f32.mrf.mxu0
        %v1780 = vadd.f32 %v1576, %v1779
        %v1781 = vpop.f32.mrf.mxu0
        %1782 = vmatprep.mubr.f32.mxu0 0.0
        %1783 = vmatmul.mubr.f32.gmra.mxu0 %v1537
        %v1784 = vpop.f32.mrf.mxu0
        %v1785 = vadd.f32 %v1576, %v1784
        %v1786 = vpop.f32.mrf.mxu0
        %1787 = vmatprep.mubr.f32.mxu0 0.0
        %1788 = vmatmul.mubr.f32.gmra.mxu0 %v1542
        %v1789 = vpop.f32.mrf.mxu0
        %v1790 = vadd.f32 %v1576, %v1789
        %v1791 = vpop.f32.mrf.mxu0
        %1792 = vmatprep.mubr.f32.mxu0 0.0
        %1793 = vmatmul.mubr.f32.gmra.mxu0 %v1547
        %v1794 = vpop.f32.mrf.mxu0
        %v1795 = vadd.f32 %v1576, %v1794
        %v1796 = vpop.f32.mrf.mxu0
        %1797 = vmatprep.mubr.f32.mxu0 0.0
        %1798 = vmatmul.mubr.f32.gmra.mxu0 %v1552
        %v1799 = vpop.f32.mrf.mxu0
        %v1800 = vadd.f32 %v1576, %v1799
        %v1801 = vpop.f32.mrf.mxu0
        %1802 = vdwg.mxu0
        %1803 = vst [vmem:[%s406] sm:$0xff] %v1645
        %1804 = vst [vmem:[%s406 + $0x8] sm:$0xff] %v1650
        %1805 = vst [vmem:[%s406 + $0x10] sm:$0xff] %v1655
        %1806 = vst [vmem:[%s406 + $0x18] sm:$0xff] %v1660
        %1807 = vst [vmem:[%s406 + $0x20] sm:$0xff] %v1665
        %1808 = vst [vmem:[%s406 + $0x28] sm:$0xff] %v1670
        %1809 = vst [vmem:[%s406 + $0x30] sm:$0xff] %v1675
        %1810 = vst [vmem:[%s406 + $0x38] sm:$0xff] %v1680
        %1811 = vst [vmem:[%s406 + $0x40] sm:$0xff] %v1685
        %1812 = vst [vmem:[%s406 + $0x48] sm:$0xff] %v1690
        %1813 = vst [vmem:[%s406 + $0x50] sm:$0xff] %v1695
        %1814 = vst [vmem:[%s406 + $0x58] sm:$0xff] %v1700
        %1815 = vst [vmem:[%s406 + $0x60] sm:$0xff] %v1705
        %1816 = vst [vmem:[%s406 + $0x68] sm:$0xff] %v1710
        %1817 = vst [vmem:[%s406 + $0x70] sm:$0xff] %v1715
        %1818 = vst [vmem:[%s406 + $0x78] sm:$0xff] %v1720
        %1819 = vst [vmem:[%s406 + $0x80] sm:$0xff] %v1725
        %1820 = vst [vmem:[%s406 + $0x88] sm:$0xff] %v1730
        %1821 = vst [vmem:[%s406 + $0x90] sm:$0xff] %v1735
        %1822 = vst [vmem:[%s406 + $0x98] sm:$0xff] %v1740
        %1823 = vst [vmem:[%s406 + $0xa0] sm:$0xff] %v1745
        %1824 = vst [vmem:[%s406 + $0xa8] sm:$0xff] %v1750
        %1825 = vst [vmem:[%s406 + $0xb0] sm:$0xff] %v1755
        %1826 = vst [vmem:[%s406 + $0xb8] sm:$0xff] %v1760
        %1827 = vst [vmem:[%s406 + $0xc0] sm:$0xff] %v1765
        %1828 = vst [vmem:[%s406 + $0xc8] sm:$0xff] %v1770
        %1829 = vst [vmem:[%s406 + $0xd0] sm:$0xff] %v1775
        %1830 = vst [vmem:[%s406 + $0xd8] sm:$0xff] %v1780
        %1831 = vst [vmem:[%s406 + $0xe0] sm:$0xff] %v1785
        %1832 = vst [vmem:[%s406 + $0xe8] sm:$0xff] %v1790
        %1833 = vst [vmem:[%s406 + $0xf0] sm:$0xff] %v1795
        %1834 = vst [vmem:[%s406 + $0xf8] sm:$0xff] %v1800
        %s1835 = sand.u32 %s291, 1
        %s1836 = scalar_lea.sflag [#allocation3], %s1835
        %s1837 = sand.u32 %s291, 1
        %s1838 = smul.addr %s1837, 256
        %s1839 = scalar_lea.vmem [#allocation2], %s1838
        // Predicated region
        $region69: #{tpu_custom_call.1} parent=67 // pred_check
          %p1840 = pneg %p301
        $region70: #{tpu_custom_call.1} parent=67 // pred_check_branch
          %1842 = sbr.rel (%p1840) target = $region72
        $region71: #{tpu_custom_call.1} parent=67 // pred_region
          %s1844 = ssub.s32 4096, 4096
          %1845 = vsyncadd %s1836, %s1844
          %s1846 = smul.addr %s26, 32
          %s1847 = smul.addr %s1846, 128
          %s1848 = scalar_lea.hbm %s12, %s1847
          %s1849 = sshll.u32 %s1839, 4
          %s1850 = int_to_ptr.vmem [resolvable:$true] %s1849
          %1855 = dma.vmem_to_hbm [thread:$0]  %s1850, 4096, %s1848, %s1836, 128, 128, 8
        $region72: #{tpu_custom_call.1} parent=67 // pred_fallthru
          _
      $region68: #{tpu_custom_call.1} parent=5 // pred_fallthru
        _
      %p1856 = scmp.le.s32.totalorder 2, %s21
      // Predicated region
      $region73: #{tpu_custom_call.1} parent=5 // pred_check
        %p1857 = pneg %p1856
      $region74: #{tpu_custom_call.1} parent=5 // pred_check_branch
        %1859 = sbr.rel (%p1857) target = $region76
      $region75: #{tpu_custom_call.1} parent=5 // pred_region
        %s1860 = ssub.s32 %s21, 2
        // Predicated region
        $region77: #{tpu_custom_call.1} parent=75 // pred_check
          %p1861 = pneg %p307
        $region78: #{tpu_custom_call.1} parent=75 // pred_check_branch
          %1863 = sbr.rel (%p1861) target = $region80
        $region79: #{tpu_custom_call.1} parent=75 // pred_region
          %s1864 = sand.u32 %s292, 1
          %s1865 = scalar_lea.sflag [#allocation3], %s1864
          %s1866 = sand.u32 %s292, 1
          %s1867 = smul.addr %s1866, 256
          %s1868 = scalar_lea.vmem [#allocation2], %s1867
          %1869 = dma.done %s1865, 4096
        $region80: #{tpu_custom_call.1} parent=75 // pred_fallthru
          _
      $region76: #{tpu_custom_call.1} parent=5 // pred_fallthru
        _
    $region6: #{tpu_custom_call.1} parent=1 // loop_footer
      %s25 = sadd.s32 1, %s21
    $region7: #{tpu_custom_call.1} parent=1 // loop_footer_branch
      %20 = sbr.rel target = $region3
    $region8: #{tpu_custom_call.1} parent=1 // loop_exit
      _
    %1870 = vsyncpa [#allocation3], 1
    %s1871 = scalar_lea.sflag [#allocation3], 1
    %1872 = vsyncpa %s1871, 1

</llo_original>
